<compile_context>
chip_gen: v7x
topology: tpu7x:2x2x1
jax: 0.10.0
libtpu: 0.0.40
codegen_flags: <defaults>
</compile_context>

<pallas_src>
import jax
import jax.numpy as jnp
from jax.experimental import pallas as pl
from jax.experimental.pallas import tpu as pltpu

CLASSES = 4
EMBEDDING_SIZE = 300
MAX_SENT_LEN = 64
LANE_PAD = 128  # lane-dense output width (first CLASSES lanes are valid)


def _round_up(a, m):
    return (a + m - 1) // m * m


def _pick_tiling():
    """Return (tb, vmem_limit_bytes) tuned per TPU generation.

    Working set per grid step at f32 x (E lane-padded 300->384):
      x block: tb*64*384*4 B per buffer, double-buffered; plus ~0.5x that in f32
      intermediates (bf16 cast, conv-tap output, shift-add slices).
      tb=128 -> ~50 MiB peak;  tb=64 -> ~25 MiB peak.
    v5e/v6e (128 MiB physical VMEM): tb=128, scoped limit 72 MiB (v5e default is 16 MiB).
    v7x / unknown (64 MiB physical): tb=64, limit 44 MiB; >=2 grid steps for 2 TCs.
    """
    try:
        cap = pltpu.get_tpu_info().vmem_capacity_bytes
    except Exception:
        cap = None
    if cap is not None and cap >= 100 * 1024 * 1024:
        return 128, 72 * 1024 * 1024
    return 64, 44 * 1024 * 1024


def attention_cnn_kernel(x_ref, wconv_ref, bconv_ref, wfc_ref, bfc_ref, out_ref):
    # x_ref:     (TB*S, E)        f32 or bf16, row index = b*S + p
    # wconv_ref: (E, CW*OC)       bf16, column kw*OC + oc == conv.weight[oc, 0, :, kw]
    # bconv_ref: (1, OC)          f32
    # wfc_ref:   (OC, LANE_PAD)   f32, zero-padded past CLASSES columns
    # bfc_ref:   (1, LANE_PAD)    f32, zero-padded past CLASSES columns
    # out_ref:   (TB, LANE_PAD)   f32 log-probs in the first CLASSES lanes
    rows, _ = x_ref.shape
    OC = bconv_ref.shape[1]
    CW = wconv_ref.shape[1] // OC
    S = MAX_SENT_LEN
    TB = rows // S
    PW = S - (CW - 1)                      # conv output width == pool width

    # ---- Conv2d(1, OC, (E, CW)) as ONE MXU matmul over all taps ----
    # Cast to bf16 here (VPU op hidden under the x DMA) instead of a wrapper-side astype,
    # so x is read from HBM exactly once.  If x already arrives as bf16 this is a no-op.
    xb = x_ref[...].astype(jnp.bfloat16)
    y = jnp.dot(xb, wconv_ref[...],
                preferred_element_type=jnp.float32)            # (TB*S, CW*OC) f32
    y3 = y.reshape(TB, S, CW * OC)                             # free split: S % 8 == 0

    # Shift-and-add the SMALL per-tap outputs (CW*OC lanes) instead of re-slicing the
    # 300-lane input:  conv[b, p, oc] = sum_kw y3[b, p + kw, kw*OC + oc]
    # TODO(synk): if x ever arrives as bf16/fp8 (DMA drops below the XLU cost on v7x),
    # replace this slice-based shift-add with pltpu.roll along S + lane-masked select +
    # a (CW*OC, OC) one-hot collapse matmul so no unaligned lane extraction remains.
    acc = y3[:, 0:PW, 0:OC]
    for kw in range(1, CW):                                    # CW is tiny; static unroll
        acc = acc + y3[:, kw:kw + PW, kw * OC:(kw + 1) * OC]

    # ---- MaxPool2d((1, PW)), then bias + ReLU (equivalent: bias is per-channel
    #      constant so it commutes with max; ReLU is monotone) -> (TB, OC) ----
    pooled = jnp.maximum(jnp.max(acc, axis=1) + bconv_ref[...], 0.0)

    # ---- attention_net: out = softmax(x * sum(x)) * sum(x) ----
    s = jnp.sum(pooled, axis=1, keepdims=True)                 # (TB, 1)
    e = pooled * s
    e = e - jnp.max(e, axis=1, keepdims=True)
    p = jnp.exp(e)
    attn = p * pl.reciprocal(jnp.sum(p, axis=1, keepdims=True), approx=False)
    attn_out = attn * s                                        # (TB, OC)

    # ---- fc (dropout == identity in eval) + log_softmax, lane-dense output ----
    logits = jnp.dot(attn_out, wfc_ref[...],
                     preferred_element_type=jnp.float32) + bfc_ref[...]  # (TB, LANE_PAD)
    lane = jax.lax.broadcasted_iota(jnp.int32, logits.shape, 1)
    valid = lane < CLASSES
    logits = jnp.where(valid, logits, jnp.float32(-1e30))      # mask padded lanes
    m = jnp.max(logits, axis=1, keepdims=True)
    z = logits - m
    lse = jnp.log(jnp.sum(jnp.where(valid, jnp.exp(z), 0.0), axis=1, keepdims=True))
    out_ref[...] = (z - lse).astype(out_ref.dtype)


def attention_cnn_forward(x, wconv, bconv, wfc, bfc, *, tb=None, vmem_limit_bytes=None):
    """x: (B, S, E) float32 (or bfloat16). Returns (B, CLASSES) log-probabilities.

    tb = batch elements per grid step; None -> auto per TPU generation (see _pick_tiling).
    The kernel is HBM-bound on all generations with f32 x; feed bf16 embeddings directly
    to halve the dominant stream (no wrapper-side cast is ever performed on x).
    """
    B, S, E = x.shape
    OC, one_ch, E2, CW = wconv.shape
    assert E == EMBEDDING_SIZE and S == MAX_SENT_LEN and E2 == E and one_ch == 1
    n_cls = wfc.shape[0]
    assert n_cls == CLASSES

    auto_tb, auto_vlim = _pick_tiling()
    if tb is None:
        tb = auto_tb
    if vmem_limit_bytes is None:
        vmem_limit_bytes = auto_vlim

    # Batch blocking: tb multiple of 8 (sublane-aligned output block); pad B to a multiple.
    tb = max(8, min(_round_up(tb, 8), _round_up(B, 8)))
    B_pad = _round_up(B, tb)
    if B_pad != B:
        x = jnp.pad(x, ((0, B_pad - B), (0, 0), (0, 0)))
    # Free metadata reshape: row index = b*S + p; DMA blocks are plain (tb*S, E) slabs
    # and the MXU sees a 2-D operand with no in-kernel merge.
    x2 = x.reshape(B_pad * S, E)

    # Parameter re-layout (tiny, plain JAX glue).
    # conv weight -> (E, CW*OC), column kw*OC + oc = wconv[oc, 0, :, kw]; bf16 for the MXU.
    wconv_k = jnp.transpose(wconv[:, 0, :, :], (1, 2, 0)).reshape(E, CW * OC)
    wconv_k = wconv_k.astype(jnp.bfloat16)
    bconv_k = bconv.reshape(1, OC).astype(jnp.float32)
    # fc weight/bias zero-padded to 128 lanes -> lane-dense output store.
    wfc_k = jnp.zeros((OC, LANE_PAD), jnp.float32).at[:, :n_cls].set(
        jnp.asarray(wfc, jnp.float32).T)
    bfc_k = jnp.zeros((1, LANE_PAD), jnp.float32).at[:, :n_cls].set(
        jnp.asarray(bfc, jnp.float32).reshape(1, n_cls))

    out = pl.pallas_call(
        attention_cnn_kernel,
        out_shape=jax.ShapeDtypeStruct((B_pad, LANE_PAD), jnp.float32),
        grid=(B_pad // tb,),
        in_specs=[
            pl.BlockSpec((tb * S, E), lambda b: (b, 0)),
            pl.BlockSpec((E, CW * OC), lambda b: (0, 0)),
            pl.BlockSpec((1, OC), lambda b: (0, 0)),
            pl.BlockSpec((OC, LANE_PAD), lambda b: (0, 0)),
            pl.BlockSpec((1, LANE_PAD), lambda b: (0, 0)),
        ],
        out_specs=pl.BlockSpec((tb, LANE_PAD), lambda b: (b, 0)),
        compiler_params=pltpu.CompilerParams(
            dimension_semantics=("parallel",),
            vmem_limit_bytes=int(vmem_limit_bytes),
        ),
    )(x2, wconv_k, bconv_k, wfc_k, bfc_k)
    return out[:B, :n_cls]


def reference_forward(x, wconv, bconv, wfc, bfc, *, input_dtype=jnp.float32):
    """Pure-JAX reference matching the PyTorch forward (dropout = identity).

    input_dtype applies the same quantization the kernel uses for the conv matmul
    (bf16 x / wconv, f32 accumulation) so the comparison isolates kernel logic from the
    deliberate bf16 MXU-input choice.
    """
    CW = wconv.shape[-1]
    PW = MAX_SENT_LEN - (CW - 1)
    hi = jax.lax.Precision.HIGHEST
    xq = x.astype(input_dtype).astype(jnp.float32)
    wq = wconv.astype(input_dtype).astype(jnp.float32)
    conv = sum(
        jnp.einsum("bwe,oe->bwo", xq[:, kw:kw + PW, :], wq[:, 0, :, kw], precision=hi)
        for kw in range(CW)
    ) + bconv[None, None, :]
    feat = jnp.maximum(conv, 0.0)
    pooled = feat.max(axis=1)                      # (B, OC)
    s = pooled.sum(axis=1, keepdims=True)          # (B, 1)
    attn = jax.nn.softmax(pooled * s, axis=1)
    att_out = attn * s
    logits = jnp.matmul(att_out, wfc.T, precision=hi) + bfc
    return jax.nn.log_softmax(logits, axis=1)


if __name__ == "__main__":
    B = 12                  # padded to 16 internally -> grid of 2 batch blocks
    OUT_CHANNELS_CONV = 8
    CHANNEL_WIDTH = 3
    TB = 8                  # small block for the demo; production default is per-chip auto

    key = jax.random.PRNGKey(0)
    k1, k2, k3, k4, k5 = jax.random.split(key, 5)

    # Deterministic synthetic parameters (shapes from the module's __init__).
    wconv = 0.05 * jax.random.normal(
        k1, (OUT_CHANNELS_CONV, 1, EMBEDDING_SIZE, CHANNEL_WIDTH), jnp.float32)
    bconv = 0.05 * jax.random.normal(k2, (OUT_CHANNELS_CONV,), jnp.float32)
    wfc = 0.1 * jax.random.normal(k3, (CLASSES, OUT_CHANNELS_CONV), jnp.float32)
    bfc = 0.1 * jax.random.normal(k4, (CLASSES,), jnp.float32)

    x = jax.random.normal(k5, (B, MAX_SENT_LEN, EMBEDDING_SIZE), jnp.float32)

    out = attention_cnn_forward(x, wconv, bconv, wfc, bfc, tb=TB)
    out = jax.block_until_ready(out)

    # Reference with the same bf16 quantization of the conv-matmul inputs.
    ref = reference_forward(x, wconv, bconv, wfc, bfc, input_dtype=jnp.bfloat16)
    assert out.shape == (B, CLASSES)
    assert jnp.allclose(out, ref, atol=2e-2, rtol=2e-2), (out, ref)

    print("KERNEL_OK")
</pallas_src>

<mosaic_0001>
module attributes {stable_mosaic.version = 11 : i64} {
  func.func @attention_cnn_kernel(%arg0: i32, %arg1: memref<512x300xf32, #tpu.memory_space<vmem>>, %arg2: memref<300x24xbf16, #tpu.memory_space<vmem>>, %arg3: memref<1x8xf32, #tpu.memory_space<vmem>>, %arg4: memref<8x128xf32, #tpu.memory_space<vmem>>, %arg5: memref<1x128xf32, #tpu.memory_space<vmem>>, %arg6: memref<8x128xf32, #tpu.memory_space<vmem>>) attributes {dimension_semantics = [#tpu.dimension_semantics<parallel>], iteration_bounds = array<i64: 2>, scalar_prefetch = 0 : i64, scratch_operands = 0 : i64, tpu.core_type = #tpu.core_type<tc>, window_params = [{transform_indices = @transform_0, window_bounds = array<i64: 512, 300>}, {pipeline_mode = #tpu.pipeline_mode<synchronous>, transform_indices = @transform_1, window_bounds = array<i64: 300, 24>}, {pipeline_mode = #tpu.pipeline_mode<synchronous>, transform_indices = @transform_2, window_bounds = array<i64: 1, 8>}, {pipeline_mode = #tpu.pipeline_mode<synchronous>, transform_indices = @transform_3, window_bounds = array<i64: 8, 128>}, {pipeline_mode = #tpu.pipeline_mode<synchronous>, transform_indices = @transform_4, window_bounds = array<i64: 1, 128>}, {transform_indices = @transform_5, window_bounds = array<i64: 8, 128>}]} {
    %c0 = arith.constant 0 : index
    %c0_0 = arith.constant 0 : index
    %0 = vector.load %arg1[%c0, %c0_0] : memref<512x300xf32, #tpu.memory_space<vmem>>, vector<512x300xf32>
    %1 = arith.truncf %0 : vector<512x300xf32> to vector<512x300xbf16>
    %c0_1 = arith.constant 0 : index
    %c0_2 = arith.constant 0 : index
    %2 = vector.load %arg2[%c0_1, %c0_2] : memref<300x24xbf16, #tpu.memory_space<vmem>>, vector<300x24xbf16>
    %cst = arith.constant dense<0.000000e+00> : vector<512x24xf32>
    %3 = tpu.matmul %1, %2, %cst {dimension_numbers = #tpu.dot_dimension_numbers<[1], [0], [0], [1], [0, 0, 1, 1], [], []>} : vector<512x300xbf16>, vector<300x24xbf16>, vector<512x24xf32> -> vector<512x24xf32>
    %4 = vector.shape_cast %3 : vector<512x24xf32> to vector<8x64x24xf32>
    %5 = vector.extract_strided_slice %4 {offsets = [0, 0, 0], sizes = [8, 62, 8], strides = [1, 1, 1]} : vector<8x64x24xf32> to vector<8x62x8xf32>
    %6 = vector.extract_strided_slice %4 {offsets = [0, 1, 8], sizes = [8, 62, 8], strides = [1, 1, 1]} : vector<8x64x24xf32> to vector<8x62x8xf32>
    %7 = arith.addf %5, %6 : vector<8x62x8xf32>
    %8 = vector.extract_strided_slice %4 {offsets = [0, 2, 16], sizes = [8, 62, 8], strides = [1, 1, 1]} : vector<8x64x24xf32> to vector<8x62x8xf32>
    %9 = arith.addf %7, %8 : vector<8x62x8xf32>
    %cst_3 = arith.constant dense<0xFF800000> : vector<8x8xf32>
    %10 = vector.multi_reduction <maximumf>, %9, %cst_3 [1] : vector<8x62x8xf32> to vector<8x8xf32>
    %c0_4 = arith.constant 0 : index
    %c0_5 = arith.constant 0 : index
    %11 = vector.load %arg3[%c0_4, %c0_5] : memref<1x8xf32, #tpu.memory_space<vmem>>, vector<1x8xf32>
    %12 = vector.broadcast %11 : vector<1x8xf32> to vector<8x8xf32>
    %13 = arith.addf %10, %12 : vector<8x8xf32>
    %cst_6 = arith.constant 0.000000e+00 : f32
    %14 = vector.broadcast %cst_6 : f32 to vector<8x8xf32>
    %15 = arith.maximumf %13, %14 : vector<8x8xf32>
    %cst_7 = arith.constant dense<0.000000e+00> : vector<8xf32>
    %16 = vector.multi_reduction <add>, %15, %cst_7 [1] : vector<8x8xf32> to vector<8xf32>
    %17 = vector.shape_cast %16 : vector<8xf32> to vector<8x1xf32>
    %18 = vector.broadcast %17 : vector<8x1xf32> to vector<8x8xf32>
    %19 = arith.mulf %15, %18 : vector<8x8xf32>
    %cst_8 = arith.constant dense<0xFF800000> : vector<8xf32>
    %20 = vector.multi_reduction <maximumf>, %19, %cst_8 [1] : vector<8x8xf32> to vector<8xf32>
    %21 = vector.shape_cast %20 : vector<8xf32> to vector<8x1xf32>
    %22 = vector.broadcast %21 : vector<8x1xf32> to vector<8x8xf32>
    %23 = arith.subf %19, %22 : vector<8x8xf32>
    %24 = math.exp %23 : vector<8x8xf32>
    %cst_9 = arith.constant dense<0.000000e+00> : vector<8xf32>
    %25 = vector.multi_reduction <add>, %24, %cst_9 [1] : vector<8x8xf32> to vector<8xf32>
    %26 = vector.shape_cast %25 : vector<8xf32> to vector<8x1xf32>
    %27 = tpu.reciprocal %26 : vector<8x1xf32> -> vector<8x1xf32>
    %28 = vector.broadcast %27 : vector<8x1xf32> to vector<8x8xf32>
    %29 = arith.mulf %24, %28 : vector<8x8xf32>
    %30 = vector.broadcast %17 : vector<8x1xf32> to vector<8x8xf32>
    %31 = arith.mulf %29, %30 : vector<8x8xf32>
    %c0_10 = arith.constant 0 : index
    %c0_11 = arith.constant 0 : index
    %32 = vector.load %arg4[%c0_10, %c0_11] : memref<8x128xf32, #tpu.memory_space<vmem>>, vector<8x128xf32>
    %cst_12 = arith.constant dense<0.000000e+00> : vector<8x128xf32>
    %33 = tpu.matmul %31, %32, %cst_12 {dimension_numbers = #tpu.dot_dimension_numbers<[1], [0], [0], [1], [0, 0, 1, 1], [], []>} : vector<8x8xf32>, vector<8x128xf32>, vector<8x128xf32> -> vector<8x128xf32>
    %c0_13 = arith.constant 0 : index
    %c0_14 = arith.constant 0 : index
    %34 = vector.load %arg5[%c0_13, %c0_14] : memref<1x128xf32, #tpu.memory_space<vmem>>, vector<1x128xf32>
    %35 = vector.broadcast %34 : vector<1x128xf32> to vector<8x128xf32>
    %36 = arith.addf %33, %35 : vector<8x128xf32>
    %37 = tpu.iota {dimensions = array<i32: 1>} : vector<8x128xi32>
    %c4_i32 = arith.constant 4 : i32
    %38 = vector.broadcast %c4_i32 : i32 to vector<8x128xi32>
    %39 = arith.cmpi slt, %37, %38 : vector<8x128xi32>
    %cst_15 = arith.constant -1.000000e+30 : f32
    %40 = vector.broadcast %cst_15 : f32 to vector<8x128xf32>
    %41 = arith.select %39, %36, %40 : vector<8x128xi1>, vector<8x128xf32>
    %cst_16 = arith.constant dense<0xFF800000> : vector<8xf32>
    %42 = vector.multi_reduction <maximumf>, %41, %cst_16 [1] : vector<8x128xf32> to vector<8xf32>
    %43 = vector.shape_cast %42 : vector<8xf32> to vector<8x1xf32>
    %44 = vector.broadcast %43 : vector<8x1xf32> to vector<8x128xf32>
    %45 = arith.subf %41, %44 : vector<8x128xf32>
    %46 = math.exp %45 : vector<8x128xf32>
    %cst_17 = arith.constant 0.000000e+00 : f32
    %47 = vector.broadcast %cst_17 : f32 to vector<8x128xf32>
    %48 = arith.select %39, %46, %47 : vector<8x128xi1>, vector<8x128xf32>
    %cst_18 = arith.constant dense<0.000000e+00> : vector<8xf32>
    %49 = vector.multi_reduction <add>, %48, %cst_18 [1] : vector<8x128xf32> to vector<8xf32>
    %50 = vector.shape_cast %49 : vector<8xf32> to vector<8x1xf32>
    %51 = math.log %50 : vector<8x1xf32>
    %52 = vector.broadcast %51 : vector<8x1xf32> to vector<8x128xf32>
    %53 = arith.subf %45, %52 : vector<8x128xf32>
    %c0_19 = arith.constant 0 : index
    %c0_20 = arith.constant 0 : index
    %54 = vector.load %arg6[%c0_19, %c0_20] : memref<8x128xf32, #tpu.memory_space<vmem>>, vector<8x128xf32>
    tpu.vector_store %arg6[%c0_19, %c0_20], %53 {strides = array<i32>} : memref<8x128xf32, #tpu.memory_space<vmem>>, vector<8x128xf32>,
    return
  }
  func.func @transform_0(%arg0: i32) -> (i32, i32) {
    %c0_i32 = arith.constant 0 : i32
    %c0_i32_0 = arith.constant 0 : i32
    return %arg0, %c0_i32 : i32, i32
  }
  func.func @transform_1(%arg0: i32) -> (i32, i32) {
    %c0_i32 = arith.constant 0 : i32
    %c0_i32_0 = arith.constant 0 : i32
    %c0_i32_1 = arith.constant 0 : i32
    return %c0_i32, %c0_i32_0 : i32, i32
  }
  func.func @transform_2(%arg0: i32) -> (i32, i32) {
    %c0_i32 = arith.constant 0 : i32
    %c0_i32_0 = arith.constant 0 : i32
    %c0_i32_1 = arith.constant 0 : i32
    return %c0_i32, %c0_i32_0 : i32, i32
  }
  func.func @transform_3(%arg0: i32) -> (i32, i32) {
    %c0_i32 = arith.constant 0 : i32
    %c0_i32_0 = arith.constant 0 : i32
    %c0_i32_1 = arith.constant 0 : i32
    return %c0_i32, %c0_i32_0 : i32, i32
  }
  func.func @transform_4(%arg0: i32) -> (i32, i32) {
    %c0_i32 = arith.constant 0 : i32
    %c0_i32_0 = arith.constant 0 : i32
    %c0_i32_1 = arith.constant 0 : i32
    return %c0_i32, %c0_i32_0 : i32, i32
  }
  func.func @transform_5(%arg0: i32) -> (i32, i32) {
    %c0_i32 = arith.constant 0 : i32
    %c0_i32_0 = arith.constant 0 : i32
    return %arg0, %c0_i32 : i32, i32
  }
}

</mosaic_0001>

<llo_original>
// kernel: tpu_custom_call.1
$region0: #{tpu_custom_call.1}
  #allocation0 [shape = 'u32[]', space=smem, size = 0x4, offset = 0x4, fixed_abs, tag = 'smem constant byte address 0x4 - core index']
  #allocation1 [shape = 'u32[144,128]{1,0:T(1,128)}', space=vmem, size = 0x12000, scoped, tag = 'internal scratch']
  %s0 = inlined_call_operand.vmem [shape: f32[1024,300], index: 0, kind: input, shape index: {}]
  %s1 = inlined_call_operand.vmem [shape: bf16[300,24], index: 1, kind: input, shape index: {}]
  %s2 = inlined_call_operand.vmem [shape: f32[1,8], index: 2, kind: input, shape index: {}]
  %s3 = inlined_call_operand.vmem [shape: f32[8,128], index: 3, kind: input, shape index: {}]
  %s4 = inlined_call_operand.vmem [shape: f32[1,128], index: 4, kind: input, shape index: {}]
  %s5 = inlined_call_operand.hbm [shape: f32[16,128], index: 5, kind: output, shape index: {}]
  %s6 = sld [smem:[#allocation0]]
  $region53: #{tpu_custom_call.1} parent=0
    _
  %s8 = ssub.s32 1, %s6
  %s9 = scalar_select 0, %s8, %s6
  $region1: #{tpu_custom_call.1} parent=0
    #allocation2 [shape = 'u8[8192]{0}', space=vmem, size = 0x2000, scoped, tag = 'output window, operand 0']
    #allocation3 [shape = 's32[2]{0}', space=sflag, size = 0x8, scoped, tag = 'scoped memory for tpu_custom_call.1']
    %10 = vsyncpa [#allocation3], 0
    %s11 = scalar_lea.sflag [#allocation3], 1
    %12 = vsyncpa %s11, 0
    loop: start=0, step=1, limit=4
    $region2: #{tpu_custom_call.1} parent=1 // loop_pre_header
      _
    $region3: #{tpu_custom_call.1} parent=1 // loop_header
      %s14 = sphi 0, %s18
      %p15 = scmp.ge.s32.totalorder %s14, 4
      %s24 = sphi 0, %s26
      %s27 = sphi 0, %s24
      %s28 = sphi 0, %s27
      %s44 = sphi 0, %s28
      %s48 = sphi 0, %s48
      %s50 = sphi 0, %s48
      %s51 = sphi 0, %s50
      %s65 = sphi 0, %s51
      %s69 = sphi 0, %s69
      %s71 = sphi 0, %s69
      %s72 = sphi 0, %s71
      %s86 = sphi 0, %s72
      %s90 = sphi 0, %s90
      %s92 = sphi 0, %s90
      %s93 = sphi 0, %s92
      %s107 = sphi 0, %s93
      %s111 = sphi 0, %s111
      %s113 = sphi 0, %s111
      %s114 = sphi 0, %s113
      %s128 = sphi 0, %s114
      %s134 = sphi 0, %s136
      %s137 = sphi 0, %s134
      %s138 = sphi 0, %s137
      %s154 = sphi 0, %s138
    $region4: #{tpu_custom_call.1} parent=1 // loop_header_branch
      %17 = sbr.rel (%p15) target = $region8
    $region5: #{tpu_custom_call.1} parent=1 // loop_body
      %s19 = ssub.s32 %s14, 1
      %s20 = ssub.s32 %s14, 2
      %s21 = sadd.s32 %s14, 1
      %s22 = ssub.s32 %s14, %s21
      %p23 = scmp.eq.s32.totalorder %s22, 0
      %s25 = sadd.s32 %s24, 1
      %s26 = scalar_select %p23, %s24, %s25
      %p29 = pneg %p23
      %p30 = scmp.eq.s32.totalorder %s14, 1
      %p31 = por %p29, %p30
      %p32 = scmp.ne.s32.totalorder %s24, %s27
      %p33 = scmp.eq.s32.totalorder %s14, 0
      %p34 = por %p32, %p33
      %p35 = scmp.ne.s32.totalorder %s24, %s27
      %p36 = scmp.eq.s32.totalorder %s19, 1
      %p37 = por %p35, %p36
      %p38 = scmp.ne.s32.totalorder %s27, %s28
      %p39 = scmp.eq.s32.totalorder %s19, 0
      %p40 = por %p38, %p39
      %p41 = scmp.ne.s32.totalorder %s27, %s28
      %p42 = scmp.eq.s32.totalorder %s20, 1
      %p43 = por %p41, %p42
      %p45 = scmp.ne.s32.totalorder %s28, %s44
      %p46 = scmp.eq.s32.totalorder %s20, 0
      %p47 = por %p45, %p46
      %s49 = sadd.s32 %s48, 1
      %p52 = scmp.eq.s32.totalorder %s14, 1
      %p53 = scmp.ne.s32.totalorder %s48, %s50
      %p54 = scmp.eq.s32.totalorder %s14, 0
      %p55 = por %p53, %p54
      %p56 = scmp.ne.s32.totalorder %s48, %s50
      %p57 = scmp.eq.s32.totalorder %s19, 1
      %p58 = por %p56, %p57
      %p59 = scmp.ne.s32.totalorder %s50, %s51
      %p60 = scmp.eq.s32.totalorder %s19, 0
      %p61 = por %p59, %p60
      %p62 = scmp.ne.s32.totalorder %s50, %s51
      %p63 = scmp.eq.s32.totalorder %s20, 1
      %p64 = por %p62, %p63
      %p66 = scmp.ne.s32.totalorder %s51, %s65
      %p67 = scmp.eq.s32.totalorder %s20, 0
      %p68 = por %p66, %p67
      %s70 = sadd.s32 %s69, 1
      %p73 = scmp.eq.s32.totalorder %s14, 1
      %p74 = scmp.ne.s32.totalorder %s69, %s71
      %p75 = scmp.eq.s32.totalorder %s14, 0
      %p76 = por %p74, %p75
      %p77 = scmp.ne.s32.totalorder %s69, %s71
      %p78 = scmp.eq.s32.totalorder %s19, 1
      %p79 = por %p77, %p78
      %p80 = scmp.ne.s32.totalorder %s71, %s72
      %p81 = scmp.eq.s32.totalorder %s19, 0
      %p82 = por %p80, %p81
      %p83 = scmp.ne.s32.totalorder %s71, %s72
      %p84 = scmp.eq.s32.totalorder %s20, 1
      %p85 = por %p83, %p84
      %p87 = scmp.ne.s32.totalorder %s72, %s86
      %p88 = scmp.eq.s32.totalorder %s20, 0
      %p89 = por %p87, %p88
      %s91 = sadd.s32 %s90, 1
      %p94 = scmp.eq.s32.totalorder %s14, 1
      %p95 = scmp.ne.s32.totalorder %s90, %s92
      %p96 = scmp.eq.s32.totalorder %s14, 0
      %p97 = por %p95, %p96
      %p98 = scmp.ne.s32.totalorder %s90, %s92
      %p99 = scmp.eq.s32.totalorder %s19, 1
      %p100 = por %p98, %p99
      %p101 = scmp.ne.s32.totalorder %s92, %s93
      %p102 = scmp.eq.s32.totalorder %s19, 0
      %p103 = por %p101, %p102
      %p104 = scmp.ne.s32.totalorder %s92, %s93
      %p105 = scmp.eq.s32.totalorder %s20, 1
      %p106 = por %p104, %p105
      %p108 = scmp.ne.s32.totalorder %s93, %s107
      %p109 = scmp.eq.s32.totalorder %s20, 0
      %p110 = por %p108, %p109
      %s112 = sadd.s32 %s111, 1
      %p115 = scmp.eq.s32.totalorder %s14, 1
      %p116 = scmp.ne.s32.totalorder %s111, %s113
      %p117 = scmp.eq.s32.totalorder %s14, 0
      %p118 = por %p116, %p117
      %p119 = scmp.ne.s32.totalorder %s111, %s113
      %p120 = scmp.eq.s32.totalorder %s19, 1
      %p121 = por %p119, %p120
      %p122 = scmp.ne.s32.totalorder %s113, %s114
      %p123 = scmp.eq.s32.totalorder %s19, 0
      %p124 = por %p122, %p123
      %p125 = scmp.ne.s32.totalorder %s113, %s114
      %p126 = scmp.eq.s32.totalorder %s20, 1
      %p127 = por %p125, %p126
      %p129 = scmp.ne.s32.totalorder %s114, %s128
      %p130 = scmp.eq.s32.totalorder %s20, 0
      %p131 = por %p129, %p130
      %s132 = ssub.s32 %s14, %s21
      %p133 = scmp.eq.s32.totalorder %s132, 0
      %s135 = sadd.s32 %s134, 1
      %s136 = scalar_select %p133, %s134, %s135
      %p139 = pneg %p133
      %p140 = scmp.eq.s32.totalorder %s14, 1
      %p141 = por %p139, %p140
      %p142 = scmp.ne.s32.totalorder %s134, %s137
      %p143 = scmp.eq.s32.totalorder %s14, 0
      %p144 = por %p142, %p143
      %p145 = scmp.ne.s32.totalorder %s134, %s137
      %p146 = scmp.eq.s32.totalorder %s19, 1
      %p147 = por %p145, %p146
      %p148 = scmp.ne.s32.totalorder %s137, %s138
      %p149 = scmp.eq.s32.totalorder %s19, 0
      %p150 = por %p148, %p149
      %p151 = scmp.ne.s32.totalorder %s137, %s138
      %p152 = scmp.eq.s32.totalorder %s20, 1
      %p153 = por %p151, %p152
      %p155 = scmp.ne.s32.totalorder %s138, %s154
      %p156 = scmp.eq.s32.totalorder %s20, 0
      %p157 = por %p155, %p156
      %p158 = scmp.le.s32.totalorder 1, %s14
      %p159 = scmp.lt.s32.totalorder %s14, 3
      %p160 = pnand %p158, %p159
      %p161 = pneg %p160
      // Predicated region
      $region9: #{tpu_custom_call.1} parent=5 // pred_check
        _
      $region10: #{tpu_custom_call.1} parent=5 // pred_check_branch
        %163 = sbr.rel (%p160) target = $region12
      $region11: #{tpu_custom_call.1} parent=5 // pred_region
        %s164 = ssub.s32 %s14, 1
        // Predicated region
        $region13: #{tpu_custom_call.1} parent=11 // pred_check
          %p165 = pneg %p61
        $region14: #{tpu_custom_call.1} parent=11 // pred_check_branch
          %167 = sbr.rel (%p165) target = $region16
        $region15: #{tpu_custom_call.1} parent=11 // pred_region
          _
        $region16: #{tpu_custom_call.1} parent=11 // pred_fallthru
          _
        // Predicated region
        $region17: #{tpu_custom_call.1} parent=11 // pred_check
          %p168 = pneg %p82
        $region18: #{tpu_custom_call.1} parent=11 // pred_check_branch
          %170 = sbr.rel (%p168) target = $region20
        $region19: #{tpu_custom_call.1} parent=11 // pred_region
          _
        $region20: #{tpu_custom_call.1} parent=11 // pred_fallthru
          _
        // Predicated region
        $region21: #{tpu_custom_call.1} parent=11 // pred_check
          %p171 = pneg %p103
        $region22: #{tpu_custom_call.1} parent=11 // pred_check_branch
          %173 = sbr.rel (%p171) target = $region24
        $region23: #{tpu_custom_call.1} parent=11 // pred_region
          _
        $region24: #{tpu_custom_call.1} parent=11 // pred_fallthru
          _
        // Predicated region
        $region25: #{tpu_custom_call.1} parent=11 // pred_check
          %p174 = pneg %p124
        $region26: #{tpu_custom_call.1} parent=11 // pred_check_branch
          %176 = sbr.rel (%p174) target = $region28
        $region27: #{tpu_custom_call.1} parent=11 // pred_region
          _
        $region28: #{tpu_custom_call.1} parent=11 // pred_fallthru
          _
      $region12: #{tpu_custom_call.1} parent=5 // pred_fallthru
        _
      %p177 = scmp.lt.s32.totalorder %s14, 2
      // Predicated region
      $region29: #{tpu_custom_call.1} parent=5 // pred_check
        %p178 = pneg %p177
      $region30: #{tpu_custom_call.1} parent=5 // pred_check_branch
        %180 = sbr.rel (%p178) target = $region32
      $region31: #{tpu_custom_call.1} parent=5 // pred_region
        // Predicated region
        $region33: #{tpu_custom_call.1} parent=31 // pred_check
          %p181 = pneg %p34
        $region34: #{tpu_custom_call.1} parent=31 // pred_check_branch
          %183 = sbr.rel (%p181) target = $region36
        $region35: #{tpu_custom_call.1} parent=31 // pred_region
          %s184 = smul.u32 64, %s14
          %p185 = scmp.lt.s32.totalorder %s184, 127
          %s186 = scalar_select %p185, %s184, 127
          %s187 = smul.addr %s186, 3
          %s188 = smul.addr %s187, 8
          %s189 = scalar_lea.vmem %s0, %s188
          %s190 = smul.u32 64, %s14
        $region36: #{tpu_custom_call.1} parent=31 // pred_fallthru
          _
      $region32: #{tpu_custom_call.1} parent=5 // pred_fallthru
        _
      %p191 = scmp.le.s32.totalorder 1, %s14
      %p192 = scmp.lt.s32.totalorder %s14, 3
      %p193 = pnand %p191, %p192
      %p194 = pneg %p193
      // Predicated region
      $region37: #{tpu_custom_call.1} parent=5 // pred_check
        _
      $region38: #{tpu_custom_call.1} parent=5 // pred_check_branch
        %196 = sbr.rel (%p193) target = $region40
      $region39: #{tpu_custom_call.1} parent=5 // pred_region
        %s197 = ssub.s32 %s14, 1
        %s198 = smul.u32 64, %s19
        %p199 = scmp.lt.s32.totalorder %s198, 127
        %s200 = scalar_select %p199, %s198, 127
        %s201 = smul.addr %s200, 3
        %s202 = smul.addr %s201, 8
        %s203 = scalar_lea.vmem %s0, %s202
        %p204 = pneg %p40
        %p205 = pneg %p37
        %p206 = pneg %p61
        %p207 = pneg %p58
        %p208 = pneg %p82
        %p209 = pneg %p79
        %p210 = pneg %p103
        %p211 = pneg %p100
        %p212 = pneg %p124
        %p213 = pneg %p121
        %p214 = pneg %p150
        %p215 = pneg %p147
        %s216 = sand.u32 %s137, 1
        %s217 = scalar_lea.sflag [#allocation3], %s216
        %s218 = sand.u32 %s137, 1
        %s219 = smul.addr %s218, 8
        %s220 = scalar_lea.vmem [#allocation2], %s219
        %s221 = smul.u32 64, %s19
        %p222 = scmp.lt.s32.totalorder %s221, 127
        %s223 = scalar_select %p222, %s221, 127
        %s224 = smul.addr %s223, 3
        %s225 = smul.addr %s224, 8
        %s226 = scalar_lea.vmem %s0, %s225
        %s227 = smul.u32 64, %s19
        %v229 = vld [vmem:[%s226] sm:$0xff]
        %v230 = vld [vmem:[%s226 + $0x8] sm:$0xff]
        %v231 = vld [vmem:[%s226 + $0x10] sm:$0xff]
        %v232 = vld [vmem:[%s226 + $0x18] sm:$0xff]
        %v233 = vld [vmem:[%s226 + $0x20] sm:$0xff]
        %v234 = vld [vmem:[%s226 + $0x28] sm:$0xff]
        %v235 = vld [vmem:[%s226 + $0x30] sm:$0xff]
        %v236 = vld [vmem:[%s226 + $0x38] sm:$0xff]
        %v237 = vld [vmem:[%s226 + $0x40] sm:$0xff]
        %v238 = vld [vmem:[%s226 + $0x48] sm:$0xff]
        %v239 = vld [vmem:[%s226 + $0x50] sm:$0xff]
        %v240 = vld [vmem:[%s226 + $0x58] sm:$0xff]
        %v241 = vld [vmem:[%s226 + $0x60] sm:$0xff]
        %v242 = vld [vmem:[%s226 + $0x68] sm:$0xff]
        %v243 = vld [vmem:[%s226 + $0x70] sm:$0xff]
        %v244 = vld [vmem:[%s226 + $0x78] sm:$0xff]
        %v245 = vld [vmem:[%s226 + $0x80] sm:$0xff]
        %v246 = vld [vmem:[%s226 + $0x88] sm:$0xff]
        %v247 = vld [vmem:[%s226 + $0x90] sm:$0xff]
        %v248 = vld [vmem:[%s226 + $0x98] sm:$0xff]
        %v249 = vld [vmem:[%s226 + $0xa0] sm:$0xff]
        %v250 = vld [vmem:[%s226 + $0xa8] sm:$0xff]
        %v251 = vld [vmem:[%s226 + $0xb0] sm:$0xff]
        %v252 = vld [vmem:[%s226 + $0xb8] sm:$0xff]
        %v253 = vld [vmem:[%s226 + $0xc0] sm:$0xff]
        %v254 = vld [vmem:[%s226 + $0xc8] sm:$0xff]
        %v255 = vld [vmem:[%s226 + $0xd0] sm:$0xff]
        %v256 = vld [vmem:[%s226 + $0xd8] sm:$0xff]
        %v257 = vld [vmem:[%s226 + $0xe0] sm:$0xff]
        %v258 = vld [vmem:[%s226 + $0xe8] sm:$0xff]
        %v259 = vld [vmem:[%s226 + $0xf0] sm:$0xff]
        %v260 = vld [vmem:[%s226 + $0xf8] sm:$0xff]
        %v261 = vld [vmem:[%s226 + $0x100] sm:$0xff]
        %v262 = vld [vmem:[%s226 + $0x108] sm:$0xff]
        %v263 = vld [vmem:[%s226 + $0x110] sm:$0xff]
        %v264 = vld [vmem:[%s226 + $0x118] sm:$0xff]
        %v265 = vld [vmem:[%s226 + $0x120] sm:$0xff]
        %v266 = vld [vmem:[%s226 + $0x128] sm:$0xff]
        %v267 = vld [vmem:[%s226 + $0x130] sm:$0xff]
        %v268 = vld [vmem:[%s226 + $0x138] sm:$0xff]
        %v269 = vld [vmem:[%s226 + $0x140] sm:$0xff]
        %v270 = vld [vmem:[%s226 + $0x148] sm:$0xff]
        %v271 = vld [vmem:[%s226 + $0x150] sm:$0xff]
        %v272 = vld [vmem:[%s226 + $0x158] sm:$0xff]
        %v273 = vld [vmem:[%s226 + $0x160] sm:$0xff]
        %v274 = vld [vmem:[%s226 + $0x168] sm:$0xff]
        %v275 = vld [vmem:[%s226 + $0x170] sm:$0xff]
        %v276 = vld [vmem:[%s226 + $0x178] sm:$0xff]
        %v277 = vld [vmem:[%s226 + $0x180] sm:$0xff]
        %v278 = vld [vmem:[%s226 + $0x188] sm:$0xff]
        %v279 = vld [vmem:[%s226 + $0x190] sm:$0xff]
        %v280 = vld [vmem:[%s226 + $0x198] sm:$0xff]
        %v281 = vld [vmem:[%s226 + $0x1a0] sm:$0xff]
        %v282 = vld [vmem:[%s226 + $0x1a8] sm:$0xff]
        %v283 = vld [vmem:[%s226 + $0x1b0] sm:$0xff]
        %v284 = vld [vmem:[%s226 + $0x1b8] sm:$0xff]
        %v285 = vld [vmem:[%s226 + $0x1c0] sm:$0xff]
        %v286 = vld [vmem:[%s226 + $0x1c8] sm:$0xff]
        %v287 = vld [vmem:[%s226 + $0x1d0] sm:$0xff]
        %v288 = vld [vmem:[%s226 + $0x1d8] sm:$0xff]
        %v289 = vld [vmem:[%s226 + $0x1e0] sm:$0xff]
        %v290 = vld [vmem:[%s226 + $0x1e8] sm:$0xff]
        %v291 = vld [vmem:[%s226 + $0x1f0] sm:$0xff]
        %v292 = vld [vmem:[%s226 + $0x1f8] sm:$0xff]
        %v293 = vld [vmem:[%s226 + $0x200] sm:$0xff]
        %v294 = vld [vmem:[%s226 + $0x208] sm:$0xff]
        %v295 = vld [vmem:[%s226 + $0x210] sm:$0xff]
        %v296 = vld [vmem:[%s226 + $0x218] sm:$0xff]
        %v297 = vld [vmem:[%s226 + $0x220] sm:$0xff]
        %v298 = vld [vmem:[%s226 + $0x228] sm:$0xff]
        %v299 = vld [vmem:[%s226 + $0x230] sm:$0xff]
        %v300 = vld [vmem:[%s226 + $0x238] sm:$0xff]
        %v301 = vld [vmem:[%s226 + $0x240] sm:$0xff]
        %v302 = vld [vmem:[%s226 + $0x248] sm:$0xff]
        %v303 = vld [vmem:[%s226 + $0x250] sm:$0xff]
        %v304 = vld [vmem:[%s226 + $0x258] sm:$0xff]
        %v305 = vld [vmem:[%s226 + $0x260] sm:$0xff]
        %v306 = vld [vmem:[%s226 + $0x268] sm:$0xff]
        %v307 = vld [vmem:[%s226 + $0x270] sm:$0xff]
        %v308 = vld [vmem:[%s226 + $0x278] sm:$0xff]
        %v309 = vld [vmem:[%s226 + $0x280] sm:$0xff]
        %v310 = vld [vmem:[%s226 + $0x288] sm:$0xff]
        %v311 = vld [vmem:[%s226 + $0x290] sm:$0xff]
        %v312 = vld [vmem:[%s226 + $0x298] sm:$0xff]
        %v313 = vld [vmem:[%s226 + $0x2a0] sm:$0xff]
        %v314 = vld [vmem:[%s226 + $0x2a8] sm:$0xff]
        %v315 = vld [vmem:[%s226 + $0x2b0] sm:$0xff]
        %v316 = vld [vmem:[%s226 + $0x2b8] sm:$0xff]
        %v317 = vld [vmem:[%s226 + $0x2c0] sm:$0xff]
        %v318 = vld [vmem:[%s226 + $0x2c8] sm:$0xff]
        %v319 = vld [vmem:[%s226 + $0x2d0] sm:$0xff]
        %v320 = vld [vmem:[%s226 + $0x2d8] sm:$0xff]
        %v321 = vld [vmem:[%s226 + $0x2e0] sm:$0xff]
        %v322 = vld [vmem:[%s226 + $0x2e8] sm:$0xff]
        %v323 = vld [vmem:[%s226 + $0x2f0] sm:$0xff]
        %v324 = vld [vmem:[%s226 + $0x2f8] sm:$0xff]
        %v325 = vld [vmem:[%s226 + $0x300] sm:$0xff]
        %v326 = vld [vmem:[%s226 + $0x308] sm:$0xff]
        %v327 = vld [vmem:[%s226 + $0x310] sm:$0xff]
        %v328 = vld [vmem:[%s226 + $0x318] sm:$0xff]
        %v329 = vld [vmem:[%s226 + $0x320] sm:$0xff]
        %v330 = vld [vmem:[%s226 + $0x328] sm:$0xff]
        %v331 = vld [vmem:[%s226 + $0x330] sm:$0xff]
        %v332 = vld [vmem:[%s226 + $0x338] sm:$0xff]
        %v333 = vld [vmem:[%s226 + $0x340] sm:$0xff]
        %v334 = vld [vmem:[%s226 + $0x348] sm:$0xff]
        %v335 = vld [vmem:[%s226 + $0x350] sm:$0xff]
        %v336 = vld [vmem:[%s226 + $0x358] sm:$0xff]
        %v337 = vld [vmem:[%s226 + $0x360] sm:$0xff]
        %v338 = vld [vmem:[%s226 + $0x368] sm:$0xff]
        %v339 = vld [vmem:[%s226 + $0x370] sm:$0xff]
        %v340 = vld [vmem:[%s226 + $0x378] sm:$0xff]
        %v341 = vld [vmem:[%s226 + $0x380] sm:$0xff]
        %v342 = vld [vmem:[%s226 + $0x388] sm:$0xff]
        %v343 = vld [vmem:[%s226 + $0x390] sm:$0xff]
        %v344 = vld [vmem:[%s226 + $0x398] sm:$0xff]
        %v345 = vld [vmem:[%s226 + $0x3a0] sm:$0xff]
        %v346 = vld [vmem:[%s226 + $0x3a8] sm:$0xff]
        %v347 = vld [vmem:[%s226 + $0x3b0] sm:$0xff]
        %v348 = vld [vmem:[%s226 + $0x3b8] sm:$0xff]
        %v349 = vld [vmem:[%s226 + $0x3c0] sm:$0xff]
        %v350 = vld [vmem:[%s226 + $0x3c8] sm:$0xff]
        %v351 = vld [vmem:[%s226 + $0x3d0] sm:$0xff]
        %v352 = vld [vmem:[%s226 + $0x3d8] sm:$0xff]
        %v353 = vld [vmem:[%s226 + $0x3e0] sm:$0xff]
        %v354 = vld [vmem:[%s226 + $0x3e8] sm:$0xff]
        %v355 = vld [vmem:[%s226 + $0x3f0] sm:$0xff]
        %v356 = vld [vmem:[%s226 + $0x3f8] sm:$0xff]
        %v357 = vld [vmem:[%s226 + $0x400] sm:$0xff]
        %v358 = vld [vmem:[%s226 + $0x408] sm:$0xff]
        %v359 = vld [vmem:[%s226 + $0x410] sm:$0xff]
        %v360 = vld [vmem:[%s226 + $0x418] sm:$0xff]
        %v361 = vld [vmem:[%s226 + $0x420] sm:$0xff]
        %v362 = vld [vmem:[%s226 + $0x428] sm:$0xff]
        %v363 = vld [vmem:[%s226 + $0x430] sm:$0xff]
        %v364 = vld [vmem:[%s226 + $0x438] sm:$0xff]
        %v365 = vld [vmem:[%s226 + $0x440] sm:$0xff]
        %v366 = vld [vmem:[%s226 + $0x448] sm:$0xff]
        %v367 = vld [vmem:[%s226 + $0x450] sm:$0xff]
        %v368 = vld [vmem:[%s226 + $0x458] sm:$0xff]
        %v369 = vld [vmem:[%s226 + $0x460] sm:$0xff]
        %v370 = vld [vmem:[%s226 + $0x468] sm:$0xff]
        %v371 = vld [vmem:[%s226 + $0x470] sm:$0xff]
        %v372 = vld [vmem:[%s226 + $0x478] sm:$0xff]
        %v373 = vld [vmem:[%s226 + $0x480] sm:$0xff]
        %v374 = vld [vmem:[%s226 + $0x488] sm:$0xff]
        %v375 = vld [vmem:[%s226 + $0x490] sm:$0xff]
        %v376 = vld [vmem:[%s226 + $0x498] sm:$0xff]
        %v377 = vld [vmem:[%s226 + $0x4a0] sm:$0xff]
        %v378 = vld [vmem:[%s226 + $0x4a8] sm:$0xff]
        %v379 = vld [vmem:[%s226 + $0x4b0] sm:$0xff]
        %v380 = vld [vmem:[%s226 + $0x4b8] sm:$0xff]
        %v381 = vld [vmem:[%s226 + $0x4c0] sm:$0xff]
        %v382 = vld [vmem:[%s226 + $0x4c8] sm:$0xff]
        %v383 = vld [vmem:[%s226 + $0x4d0] sm:$0xff]
        %v384 = vld [vmem:[%s226 + $0x4d8] sm:$0xff]
        %v385 = vld [vmem:[%s226 + $0x4e0] sm:$0xff]
        %v386 = vld [vmem:[%s226 + $0x4e8] sm:$0xff]
        %v387 = vld [vmem:[%s226 + $0x4f0] sm:$0xff]
        %v388 = vld [vmem:[%s226 + $0x4f8] sm:$0xff]
        %v389 = vld [vmem:[%s226 + $0x500] sm:$0xff]
        %v390 = vld [vmem:[%s226 + $0x508] sm:$0xff]
        %v391 = vld [vmem:[%s226 + $0x510] sm:$0xff]
        %v392 = vld [vmem:[%s226 + $0x518] sm:$0xff]
        %v393 = vld [vmem:[%s226 + $0x520] sm:$0xff]
        %v394 = vld [vmem:[%s226 + $0x528] sm:$0xff]
        %v395 = vld [vmem:[%s226 + $0x530] sm:$0xff]
        %v396 = vld [vmem:[%s226 + $0x538] sm:$0xff]
        %v397 = vld [vmem:[%s226 + $0x540] sm:$0xff]
        %v398 = vld [vmem:[%s226 + $0x548] sm:$0xff]
        %v399 = vld [vmem:[%s226 + $0x550] sm:$0xff]
        %v400 = vld [vmem:[%s226 + $0x558] sm:$0xff]
        %v401 = vld [vmem:[%s226 + $0x560] sm:$0xff]
        %v402 = vld [vmem:[%s226 + $0x568] sm:$0xff]
        %v403 = vld [vmem:[%s226 + $0x570] sm:$0xff]
        %v404 = vld [vmem:[%s226 + $0x578] sm:$0xff]
        %v405 = vld [vmem:[%s226 + $0x580] sm:$0xff]
        %v406 = vld [vmem:[%s226 + $0x588] sm:$0xff]
        %v407 = vld [vmem:[%s226 + $0x590] sm:$0xff]
        %v408 = vld [vmem:[%s226 + $0x598] sm:$0xff]
        %v409 = vld [vmem:[%s226 + $0x5a0] sm:$0xff]
        %v410 = vld [vmem:[%s226 + $0x5a8] sm:$0xff]
        %v411 = vld [vmem:[%s226 + $0x5b0] sm:$0xff]
        %v412 = vld [vmem:[%s226 + $0x5b8] sm:$0xff]
        %v413 = vld [vmem:[%s226 + $0x5c0] sm:$0xff]
        %v414 = vld [vmem:[%s226 + $0x5c8] sm:$0xff]
        %v415 = vld [vmem:[%s226 + $0x5d0] sm:$0xff]
        %v416 = vld [vmem:[%s226 + $0x5d8] sm:$0xff]
        %v417 = vld [vmem:[%s226 + $0x5e0] sm:$0xff]
        %v418 = vld [vmem:[%s226 + $0x5e8] sm:$0xff]
        %v419 = vld [vmem:[%s226 + $0x5f0] sm:$0xff]
        %v420 = vld [vmem:[%s226 + $0x5f8] sm:$0xff]
        %v421 = vpack.c.bf16 %v232, %v229
        %v422 = vpack.c.bf16 %v233, %v230
        %v423 = vpack.c.bf16 %v234, %v231
        %v424 = vpack.c.bf16 %v238, %v235
        %v425 = vpack.c.bf16 %v239, %v236
        %v426 = vpack.c.bf16 %v240, %v237
        %v427 = vpack.c.bf16 %v244, %v241
        %v428 = vpack.c.bf16 %v245, %v242
        %v429 = vpack.c.bf16 %v246, %v243
        %v430 = vpack.c.bf16 %v250, %v247
        %v431 = vpack.c.bf16 %v251, %v248
        %v432 = vpack.c.bf16 %v252, %v249
        %v433 = vpack.c.bf16 %v256, %v253
        %v434 = vpack.c.bf16 %v257, %v254
        %v435 = vpack.c.bf16 %v258, %v255
        %v436 = vpack.c.bf16 %v262, %v259
        %v437 = vpack.c.bf16 %v263, %v260
        %v438 = vpack.c.bf16 %v264, %v261
        %v439 = vpack.c.bf16 %v268, %v265
        %v440 = vpack.c.bf16 %v269, %v266
        %v441 = vpack.c.bf16 %v270, %v267
        %v442 = vpack.c.bf16 %v274, %v271
        %v443 = vpack.c.bf16 %v275, %v272
        %v444 = vpack.c.bf16 %v276, %v273
        %v445 = vpack.c.bf16 %v280, %v277
        %v446 = vpack.c.bf16 %v281, %v278
        %v447 = vpack.c.bf16 %v282, %v279
        %v448 = vpack.c.bf16 %v286, %v283
        %v449 = vpack.c.bf16 %v287, %v284
        %v450 = vpack.c.bf16 %v288, %v285
        %v451 = vpack.c.bf16 %v292, %v289
        %v452 = vpack.c.bf16 %v293, %v290
        %v453 = vpack.c.bf16 %v294, %v291
        %v454 = vpack.c.bf16 %v298, %v295
        %v455 = vpack.c.bf16 %v299, %v296
        %v456 = vpack.c.bf16 %v300, %v297
        %v457 = vpack.c.bf16 %v304, %v301
        %v458 = vpack.c.bf16 %v305, %v302
        %v459 = vpack.c.bf16 %v306, %v303
        %v460 = vpack.c.bf16 %v310, %v307
        %v461 = vpack.c.bf16 %v311, %v308
        %v462 = vpack.c.bf16 %v312, %v309
        %v463 = vpack.c.bf16 %v316, %v313
        %v464 = vpack.c.bf16 %v317, %v314
        %v465 = vpack.c.bf16 %v318, %v315
        %v466 = vpack.c.bf16 %v322, %v319
        %v467 = vpack.c.bf16 %v323, %v320
        %v468 = vpack.c.bf16 %v324, %v321
        %v469 = vpack.c.bf16 %v328, %v325
        %v470 = vpack.c.bf16 %v329, %v326
        %v471 = vpack.c.bf16 %v330, %v327
        %v472 = vpack.c.bf16 %v334, %v331
        %v473 = vpack.c.bf16 %v335, %v332
        %v474 = vpack.c.bf16 %v336, %v333
        %v475 = vpack.c.bf16 %v340, %v337
        %v476 = vpack.c.bf16 %v341, %v338
        %v477 = vpack.c.bf16 %v342, %v339
        %v478 = vpack.c.bf16 %v346, %v343
        %v479 = vpack.c.bf16 %v347, %v344
        %v480 = vpack.c.bf16 %v348, %v345
        %v481 = vpack.c.bf16 %v352, %v349
        %v482 = vpack.c.bf16 %v353, %v350
        %v483 = vpack.c.bf16 %v354, %v351
        %v484 = vpack.c.bf16 %v358, %v355
        %v485 = vpack.c.bf16 %v359, %v356
        %v486 = vpack.c.bf16 %v360, %v357
        %v487 = vpack.c.bf16 %v364, %v361
        %v488 = vpack.c.bf16 %v365, %v362
        %v489 = vpack.c.bf16 %v366, %v363
        %v490 = vpack.c.bf16 %v370, %v367
        %v491 = vpack.c.bf16 %v371, %v368
        %v492 = vpack.c.bf16 %v372, %v369
        %v493 = vpack.c.bf16 %v376, %v373
        %v494 = vpack.c.bf16 %v377, %v374
        %v495 = vpack.c.bf16 %v378, %v375
        %v496 = vpack.c.bf16 %v382, %v379
        %v497 = vpack.c.bf16 %v383, %v380
        %v498 = vpack.c.bf16 %v384, %v381
        %v499 = vpack.c.bf16 %v388, %v385
        %v500 = vpack.c.bf16 %v389, %v386
        %v501 = vpack.c.bf16 %v390, %v387
        %v502 = vpack.c.bf16 %v394, %v391
        %v503 = vpack.c.bf16 %v395, %v392
        %v504 = vpack.c.bf16 %v396, %v393
        %v505 = vpack.c.bf16 %v400, %v397
        %v506 = vpack.c.bf16 %v401, %v398
        %v507 = vpack.c.bf16 %v402, %v399
        %v508 = vpack.c.bf16 %v406, %v403
        %v509 = vpack.c.bf16 %v407, %v404
        %v510 = vpack.c.bf16 %v408, %v405
        %v511 = vpack.c.bf16 %v412, %v409
        %v512 = vpack.c.bf16 %v413, %v410
        %v513 = vpack.c.bf16 %v414, %v411
        %v514 = vpack.c.bf16 %v418, %v415
        %v515 = vpack.c.bf16 %v419, %v416
        %v516 = vpack.c.bf16 %v420, %v417
        %v517 = vld [vmem:[%s1] sm:$0xf]
        %v518 = vld [vmem:[%s1 + $0x4] sm:$0xf]
        %v519 = vld [vmem:[%s1 + $0x8] sm:$0xf]
        %v520 = vld [vmem:[%s1 + $0xc] sm:$0xf]
        %v521 = vld [vmem:[%s1 + $0x10] sm:$0xf]
        %v522 = vld [vmem:[%s1 + $0x14] sm:$0xf]
        %v523 = vld [vmem:[%s1 + $0x18] sm:$0xf]
        %v524 = vld [vmem:[%s1 + $0x1c] sm:$0xf]
        %v525 = vld [vmem:[%s1 + $0x20] sm:$0xf]
        %v526 = vld [vmem:[%s1 + $0x24] sm:$0xf]
        %v527 = vld [vmem:[%s1 + $0x28] sm:$0xf]
        %v528 = vld [vmem:[%s1 + $0x2c] sm:$0xf]
        %v529 = vld [vmem:[%s1 + $0x30] sm:$0xf]
        %v530 = vld [vmem:[%s1 + $0x34] sm:$0xf]
        %v531 = vld [vmem:[%s1 + $0x38] sm:$0xf]
        %v532 = vld [vmem:[%s1 + $0x3c] sm:$0xf]
        %v533 = vld [vmem:[%s1 + $0x40] sm:$0xf]
        %v534 = vld [vmem:[%s1 + $0x44] sm:$0xf]
        %v535 = vld [vmem:[%s1 + $0x48] sm:$0xf]
        %v536 = vld [vmem:[%s1 + $0x4c] sm:$0xf]
        %v537 = vld [vmem:[%s1 + $0x50] sm:$0xf]
        %v538 = vld [vmem:[%s1 + $0x54] sm:$0xf]
        %v539 = vld [vmem:[%s1 + $0x58] sm:$0xf]
        %v540 = vld [vmem:[%s1 + $0x5c] sm:$0xf]
        %v541 = vld [vmem:[%s1 + $0x60] sm:$0xf]
        %v542 = vld [vmem:[%s1 + $0x64] sm:$0xf]
        %v543 = vld [vmem:[%s1 + $0x68] sm:$0xf]
        %v544 = vld [vmem:[%s1 + $0x6c] sm:$0xf]
        %v545 = vld [vmem:[%s1 + $0x70] sm:$0xf]
        %v546 = vld [vmem:[%s1 + $0x74] sm:$0xf]
        %v547 = vld [vmem:[%s1 + $0x78] sm:$0xf]
        %v548 = vld [vmem:[%s1 + $0x7c] sm:$0xf]
        %v549 = vld [vmem:[%s1 + $0x80] sm:$0xf]
        %v550 = vld [vmem:[%s1 + $0x84] sm:$0xf]
        %v551 = vld [vmem:[%s1 + $0x88] sm:$0xf]
        %v552 = vld [vmem:[%s1 + $0x8c] sm:$0xf]
        %v553 = vld [vmem:[%s1 + $0x90] sm:$0xf]
        %v554 = vld [vmem:[%s1 + $0x94] sm:$0x3]
        %v593 = vunpack.c.l.b16 %v517
        %v594 = vunpack.c.l.b16 %v518
        %v595 = vunpack.c.l.b16 %v519
        %v596 = vunpack.c.l.b16 %v520
        %v597 = vunpack.c.l.b16 %v521
        %v598 = vunpack.c.l.b16 %v522
        %v599 = vunpack.c.l.b16 %v523
        %v600 = vunpack.c.l.b16 %v524
        %v601 = vunpack.c.l.b16 %v525
        %v602 = vunpack.c.l.b16 %v526
        %v603 = vunpack.c.l.b16 %v527
        %v604 = vunpack.c.l.b16 %v528
        %v605 = vunpack.c.l.b16 %v529
        %v606 = vunpack.c.l.b16 %v530
        %v607 = vunpack.c.l.b16 %v531
        %v608 = vunpack.c.l.b16 %v532
        %v609 = vunpack.c.l.b16 %v533
        %v610 = vunpack.c.l.b16 %v534
        %v611 = vunpack.c.l.b16 %v535
        %v612 = vunpack.c.l.b16 %v536
        %v613 = vunpack.c.l.b16 %v537
        %v614 = vunpack.c.l.b16 %v538
        %v615 = vunpack.c.l.b16 %v539
        %v616 = vunpack.c.l.b16 %v540
        %v617 = vunpack.c.l.b16 %v541
        %v618 = vunpack.c.l.b16 %v542
        %v619 = vunpack.c.l.b16 %v543
        %v620 = vunpack.c.l.b16 %v544
        %v621 = vunpack.c.l.b16 %v545
        %v622 = vunpack.c.l.b16 %v546
        %v623 = vunpack.c.l.b16 %v547
        %v624 = vunpack.c.l.b16 %v548
        %v625 = vunpack.c.l.b16 %v549
        %v626 = vunpack.c.l.b16 %v550
        %v627 = vunpack.c.l.b16 %v551
        %v628 = vunpack.c.l.b16 %v552
        %v629 = vunpack.c.l.b16 %v553
        %v630 = vunpack.c.l.b16 %v554
        %v631 = vpack.c.b16 %v594, %v593
        %v632 = vpack.c.b16 %v596, %v595
        %v633 = vpack.c.b16 %v598, %v597
        %v634 = vpack.c.b16 %v600, %v599
        %v635 = vpack.c.b16 %v602, %v601
        %v636 = vpack.c.b16 %v604, %v603
        %v637 = vpack.c.b16 %v606, %v605
        %v638 = vpack.c.b16 %v608, %v607
        %v639 = vpack.c.b16 %v610, %v609
        %v640 = vpack.c.b16 %v612, %v611
        %v641 = vpack.c.b16 %v614, %v613
        %v642 = vpack.c.b16 %v616, %v615
        %v643 = vpack.c.b16 %v618, %v617
        %v644 = vpack.c.b16 %v620, %v619
        %v645 = vpack.c.b16 %v622, %v621
        %v646 = vpack.c.b16 %v624, %v623
        %v647 = vpack.c.b16 %v626, %v625
        %v648 = vpack.c.b16 %v628, %v627
        %v649 = vpack.c.b16 %v630, %v629
        %vm668 = vcmask 359424
        %v670 = vsel %vm668, %v423, 0
        %v673 = vsel %vm668, %v426, 0
        %v676 = vsel %vm668, %v429, 0
        %v679 = vsel %vm668, %v432, 0
        %v682 = vsel %vm668, %v435, 0
        %v685 = vsel %vm668, %v438, 0
        %v688 = vsel %vm668, %v441, 0
        %v691 = vsel %vm668, %v444, 0
        %v694 = vsel %vm668, %v447, 0
        %v697 = vsel %vm668, %v450, 0
        %v700 = vsel %vm668, %v453, 0
        %v703 = vsel %vm668, %v456, 0
        %v706 = vsel %vm668, %v459, 0
        %v709 = vsel %vm668, %v462, 0
        %v712 = vsel %vm668, %v465, 0
        %v715 = vsel %vm668, %v468, 0
        %v718 = vsel %vm668, %v471, 0
        %v721 = vsel %vm668, %v474, 0
        %v724 = vsel %vm668, %v477, 0
        %v727 = vsel %vm668, %v480, 0
        %v730 = vsel %vm668, %v483, 0
        %v733 = vsel %vm668, %v486, 0
        %v736 = vsel %vm668, %v489, 0
        %v739 = vsel %vm668, %v492, 0
        %v742 = vsel %vm668, %v495, 0
        %v745 = vsel %vm668, %v498, 0
        %v748 = vsel %vm668, %v501, 0
        %v751 = vsel %vm668, %v504, 0
        %v754 = vsel %vm668, %v507, 0
        %v757 = vsel %vm668, %v510, 0
        %v760 = vsel %vm668, %v513, 0
        %v763 = vsel %vm668, %v516, 0
        %vm765 = vcmask 1045504
        %v767 = vsel %vm765, %v649, 0
        %769 = vmatprep.subr.bf16.mxu0 0
        %770 = vmatpush1.bf16.msra.mxu0 %v631
        %771 = vmatprep.subr.bf16.mxu0 0
        %772 = vmatpush1.bf16.msra.mxu0 %v632
        %773 = vmatprep.subr.bf16.mxu0 0
        %774 = vmatpush1.bf16.msra.mxu0 %v633
        %775 = vmatprep.subr.bf16.mxu0 0
        %776 = vmatpush1.bf16.msra.mxu0 %v634
        %777 = vmatprep.subr.bf16.mxu0 0
        %778 = vmatpush1.bf16.msra.mxu0 %v635
        %779 = vmatprep.subr.bf16.mxu0 0
        %780 = vmatpush1.bf16.msra.mxu0 %v636
        %781 = vmatprep.subr.bf16.mxu0 0
        %782 = vmatpush1.bf16.msra.mxu0 %v637
        %783 = vmatprep.subr.bf16.mxu0 0
        %784 = vmatpush1.bf16.msra.mxu0 %v638
        %785 = vmatprep.subr.bf16.mxu0 0
        %786 = vmatpush1.bf16.msra.mxu0 %v639
        %787 = vmatprep.subr.bf16.mxu0 0
        %788 = vmatpush1.bf16.msra.mxu0 %v640
        %789 = vmatprep.subr.bf16.mxu0 0
        %790 = vmatpush1.bf16.msra.mxu0 %v641
        %791 = vmatprep.subr.bf16.mxu0 0
        %792 = vmatpush1.bf16.msra.mxu0 %v642
        %793 = vmatprep.subr.bf16.mxu0 0
        %794 = vmatpush1.bf16.msra.mxu0 %v643
        %795 = vmatprep.subr.bf16.mxu0 0
        %796 = vmatpush1.bf16.msra.mxu0 %v644
        %797 = vmatprep.subr.bf16.mxu0 0
        %798 = vmatpush1.bf16.msra.mxu0 %v645
        %799 = vmatprep.subr.bf16.mxu0 0
        %800 = vmatpush1.bf16.msra.mxu0 %v646
        %801 = vmatprep.mubr.bf16.mxu0 %v422
        %802 = vmatmul.mubr.bf16.gmra.mrb[0].mxu0 %v421
        %v803 = vpop.f32.mrb[0].mxu0
        %v804 = vadd.f32 0.0, %v803
        %v805 = vpop.f32.mrb[0].mxu0
        %v806 = vpop.f32.mrb[0].mxu0
        %v807 = vadd.f32 0.0, %v806
        %v808 = vpop.f32.mrb[0].mxu0
        %809 = vmatprep.mubr.bf16.mxu0 %v425
        %810 = vmatmul.mubr.bf16.gmra.mrb[0].mxu0 %v424
        %v811 = vpop.f32.mrb[0].mxu0
        %v812 = vadd.f32 0.0, %v811
        %v813 = vpop.f32.mrb[0].mxu0
        %v814 = vpop.f32.mrb[0].mxu0
        %v815 = vadd.f32 0.0, %v814
        %v816 = vpop.f32.mrb[0].mxu0
        %817 = vmatprep.mubr.bf16.mxu0 %v428
        %818 = vmatmul.mubr.bf16.gmra.mrb[0].mxu0 %v427
        %v819 = vpop.f32.mrb[0].mxu0
        %v820 = vadd.f32 0.0, %v819
        %v821 = vpop.f32.mrb[0].mxu0
        %v822 = vpop.f32.mrb[0].mxu0
        %v823 = vadd.f32 0.0, %v822
        %v824 = vpop.f32.mrb[0].mxu0
        %825 = vmatprep.mubr.bf16.mxu0 %v431
        %826 = vmatmul.mubr.bf16.gmra.mrb[0].mxu0 %v430
        %v827 = vpop.f32.mrb[0].mxu0
        %v828 = vadd.f32 0.0, %v827
        %v829 = vpop.f32.mrb[0].mxu0
        %v830 = vpop.f32.mrb[0].mxu0
        %v831 = vadd.f32 0.0, %v830
        %v832 = vpop.f32.mrb[0].mxu0
        %833 = vmatprep.mubr.bf16.mxu0 %v434
        %834 = vmatmul.mubr.bf16.gmra.mrb[0].mxu0 %v433
        %v835 = vpop.f32.mrb[0].mxu0
        %v836 = vadd.f32 0.0, %v835
        %v837 = vpop.f32.mrb[0].mxu0
        %v838 = vpop.f32.mrb[0].mxu0
        %v839 = vadd.f32 0.0, %v838
        %v840 = vpop.f32.mrb[0].mxu0
        %841 = vmatprep.mubr.bf16.mxu0 %v437
        %842 = vmatmul.mubr.bf16.gmra.mrb[0].mxu0 %v436
        %v843 = vpop.f32.mrb[0].mxu0
        %v844 = vadd.f32 0.0, %v843
        %v845 = vpop.f32.mrb[0].mxu0
        %v846 = vpop.f32.mrb[0].mxu0
        %v847 = vadd.f32 0.0, %v846
        %v848 = vpop.f32.mrb[0].mxu0
        %849 = vmatprep.mubr.bf16.mxu0 %v440
        %850 = vmatmul.mubr.bf16.gmra.mrb[0].mxu0 %v439
        %v851 = vpop.f32.mrb[0].mxu0
        %v852 = vadd.f32 0.0, %v851
        %v853 = vpop.f32.mrb[0].mxu0
        %v854 = vpop.f32.mrb[0].mxu0
        %v855 = vadd.f32 0.0, %v854
        %v856 = vpop.f32.mrb[0].mxu0
        %857 = vmatprep.mubr.bf16.mxu0 %v443
        %858 = vmatmul.mubr.bf16.gmra.mrb[0].mxu0 %v442
        %v859 = vpop.f32.mrb[0].mxu0
        %v860 = vadd.f32 0.0, %v859
        %v861 = vpop.f32.mrb[0].mxu0
        %v862 = vpop.f32.mrb[0].mxu0
        %v863 = vadd.f32 0.0, %v862
        %v864 = vpop.f32.mrb[0].mxu0
        %865 = vmatprep.mubr.bf16.mxu0 %v446
        %866 = vmatmul.mubr.bf16.gmra.mrb[0].mxu0 %v445
        %v867 = vpop.f32.mrb[0].mxu0
        %v868 = vadd.f32 0.0, %v867
        %v869 = vpop.f32.mrb[0].mxu0
        %v870 = vpop.f32.mrb[0].mxu0
        %v871 = vadd.f32 0.0, %v870
        %v872 = vpop.f32.mrb[0].mxu0
        %873 = vmatprep.mubr.bf16.mxu0 %v449
        %874 = vmatmul.mubr.bf16.gmra.mrb[0].mxu0 %v448
        %v875 = vpop.f32.mrb[0].mxu0
        %v876 = vadd.f32 0.0, %v875
        %v877 = vpop.f32.mrb[0].mxu0
        %v878 = vpop.f32.mrb[0].mxu0
        %v879 = vadd.f32 0.0, %v878
        %v880 = vpop.f32.mrb[0].mxu0
        %881 = vmatprep.mubr.bf16.mxu0 %v452
        %882 = vmatmul.mubr.bf16.gmra.mrb[0].mxu0 %v451
        %v883 = vpop.f32.mrb[0].mxu0
        %v884 = vadd.f32 0.0, %v883
        %v885 = vpop.f32.mrb[0].mxu0
        %v886 = vpop.f32.mrb[0].mxu0
        %v887 = vadd.f32 0.0, %v886
        %v888 = vpop.f32.mrb[0].mxu0
        %889 = vmatprep.mubr.bf16.mxu0 %v455
        %890 = vmatmul.mubr.bf16.gmra.mrb[0].mxu0 %v454
        %v891 = vpop.f32.mrb[0].mxu0
        %v892 = vadd.f32 0.0, %v891
        %v893 = vpop.f32.mrb[0].mxu0
        %v894 = vpop.f32.mrb[0].mxu0
        %v895 = vadd.f32 0.0, %v894
        %v896 = vpop.f32.mrb[0].mxu0
        %897 = vmatprep.mubr.bf16.mxu0 %v458
        %898 = vmatmul.mubr.bf16.gmra.mrb[0].mxu0 %v457
        %v899 = vpop.f32.mrb[0].mxu0
        %v900 = vadd.f32 0.0, %v899
        %v901 = vpop.f32.mrb[0].mxu0
        %v902 = vpop.f32.mrb[0].mxu0
        %v903 = vadd.f32 0.0, %v902
        %v904 = vpop.f32.mrb[0].mxu0
        %905 = vmatprep.mubr.bf16.mxu0 %v461
        %906 = vmatmul.mubr.bf16.gmra.mrb[0].mxu0 %v460
        %v907 = vpop.f32.mrb[0].mxu0
        %v908 = vadd.f32 0.0, %v907
        %v909 = vpop.f32.mrb[0].mxu0
        %v910 = vpop.f32.mrb[0].mxu0
        %v911 = vadd.f32 0.0, %v910
        %v912 = vpop.f32.mrb[0].mxu0
        %913 = vmatprep.mubr.bf16.mxu0 %v464
        %914 = vmatmul.mubr.bf16.gmra.mrb[0].mxu0 %v463
        %v915 = vpop.f32.mrb[0].mxu0
        %v916 = vadd.f32 0.0, %v915
        %v917 = vpop.f32.mrb[0].mxu0
        %v918 = vpop.f32.mrb[0].mxu0
        %v919 = vadd.f32 0.0, %v918
        %v920 = vpop.f32.mrb[0].mxu0
        %921 = vmatprep.mubr.bf16.mxu0 %v467
        %922 = vmatmul.mubr.bf16.gmra.mrb[0].mxu0 %v466
        %v923 = vpop.f32.mrb[0].mxu0
        %v924 = vadd.f32 0.0, %v923
        %v925 = vpop.f32.mrb[0].mxu0
        %v926 = vpop.f32.mrb[0].mxu0
        %v927 = vadd.f32 0.0, %v926
        %v928 = vpop.f32.mrb[0].mxu0
        %929 = vmatprep.mubr.bf16.mxu0 %v470
        %930 = vmatmul.mubr.bf16.gmra.mrb[0].mxu0 %v469
        %v931 = vpop.f32.mrb[0].mxu0
        %v932 = vadd.f32 0.0, %v931
        %v933 = vpop.f32.mrb[0].mxu0
        %v934 = vpop.f32.mrb[0].mxu0
        %v935 = vadd.f32 0.0, %v934
        %v936 = vpop.f32.mrb[0].mxu0
        %937 = vmatprep.mubr.bf16.mxu0 %v473
        %938 = vmatmul.mubr.bf16.gmra.mrb[0].mxu0 %v472
        %v939 = vpop.f32.mrb[0].mxu0
        %v940 = vadd.f32 0.0, %v939
        %v941 = vpop.f32.mrb[0].mxu0
        %v942 = vpop.f32.mrb[0].mxu0
        %v943 = vadd.f32 0.0, %v942
        %v944 = vpop.f32.mrb[0].mxu0
        %945 = vmatprep.mubr.bf16.mxu0 %v476
        %946 = vmatmul.mubr.bf16.gmra.mrb[0].mxu0 %v475
        %v947 = vpop.f32.mrb[0].mxu0
        %v948 = vadd.f32 0.0, %v947
        %v949 = vpop.f32.mrb[0].mxu0
        %v950 = vpop.f32.mrb[0].mxu0
        %v951 = vadd.f32 0.0, %v950
        %v952 = vpop.f32.mrb[0].mxu0
        %953 = vmatprep.mubr.bf16.mxu0 %v479
        %954 = vmatmul.mubr.bf16.gmra.mrb[0].mxu0 %v478
        %v955 = vpop.f32.mrb[0].mxu0
        %v956 = vadd.f32 0.0, %v955
        %v957 = vpop.f32.mrb[0].mxu0
        %v958 = vpop.f32.mrb[0].mxu0
        %v959 = vadd.f32 0.0, %v958
        %v960 = vpop.f32.mrb[0].mxu0
        %961 = vmatprep.mubr.bf16.mxu0 %v482
        %962 = vmatmul.mubr.bf16.gmra.mrb[0].mxu0 %v481
        %v963 = vpop.f32.mrb[0].mxu0
        %v964 = vadd.f32 0.0, %v963
        %v965 = vpop.f32.mrb[0].mxu0
        %v966 = vpop.f32.mrb[0].mxu0
        %v967 = vadd.f32 0.0, %v966
        %v968 = vpop.f32.mrb[0].mxu0
        %969 = vmatprep.mubr.bf16.mxu0 %v485
        %970 = vmatmul.mubr.bf16.gmra.mrb[0].mxu0 %v484
        %v971 = vpop.f32.mrb[0].mxu0
        %v972 = vadd.f32 0.0, %v971
        %v973 = vpop.f32.mrb[0].mxu0
        %v974 = vpop.f32.mrb[0].mxu0
        %v975 = vadd.f32 0.0, %v974
        %v976 = vpop.f32.mrb[0].mxu0
        %977 = vmatprep.mubr.bf16.mxu0 %v488
        %978 = vmatmul.mubr.bf16.gmra.mrb[0].mxu0 %v487
        %v979 = vpop.f32.mrb[0].mxu0
        %v980 = vadd.f32 0.0, %v979
        %v981 = vpop.f32.mrb[0].mxu0
        %v982 = vpop.f32.mrb[0].mxu0
        %v983 = vadd.f32 0.0, %v982
        %v984 = vpop.f32.mrb[0].mxu0
        %985 = vmatprep.mubr.bf16.mxu0 %v491
        %986 = vmatmul.mubr.bf16.gmra.mrb[0].mxu0 %v490
        %v987 = vpop.f32.mrb[0].mxu0
        %v988 = vadd.f32 0.0, %v987
        %v989 = vpop.f32.mrb[0].mxu0
        %v990 = vpop.f32.mrb[0].mxu0
        %v991 = vadd.f32 0.0, %v990
        %v992 = vpop.f32.mrb[0].mxu0
        %993 = vmatprep.mubr.bf16.mxu0 %v494
        %994 = vmatmul.mubr.bf16.gmra.mrb[0].mxu0 %v493
        %v995 = vpop.f32.mrb[0].mxu0
        %v996 = vadd.f32 0.0, %v995
        %v997 = vpop.f32.mrb[0].mxu0
        %v998 = vpop.f32.mrb[0].mxu0
        %v999 = vadd.f32 0.0, %v998
        %v1000 = vpop.f32.mrb[0].mxu0
        %1001 = vmatprep.mubr.bf16.mxu0 %v497
        %1002 = vmatmul.mubr.bf16.gmra.mrb[0].mxu0 %v496
        %v1003 = vpop.f32.mrb[0].mxu0
        %v1004 = vadd.f32 0.0, %v1003
        %v1005 = vpop.f32.mrb[0].mxu0
        %v1006 = vpop.f32.mrb[0].mxu0
        %v1007 = vadd.f32 0.0, %v1006
        %v1008 = vpop.f32.mrb[0].mxu0
        %1009 = vmatprep.mubr.bf16.mxu0 %v500
        %1010 = vmatmul.mubr.bf16.gmra.mrb[0].mxu0 %v499
        %v1011 = vpop.f32.mrb[0].mxu0
        %v1012 = vadd.f32 0.0, %v1011
        %v1013 = vpop.f32.mrb[0].mxu0
        %v1014 = vpop.f32.mrb[0].mxu0
        %v1015 = vadd.f32 0.0, %v1014
        %v1016 = vpop.f32.mrb[0].mxu0
        %1017 = vmatprep.mubr.bf16.mxu0 %v503
        %1018 = vmatmul.mubr.bf16.gmra.mrb[0].mxu0 %v502
        %v1019 = vpop.f32.mrb[0].mxu0
        %v1020 = vadd.f32 0.0, %v1019
        %v1021 = vpop.f32.mrb[0].mxu0
        %v1022 = vpop.f32.mrb[0].mxu0
        %v1023 = vadd.f32 0.0, %v1022
        %v1024 = vpop.f32.mrb[0].mxu0
        %1025 = vmatprep.mubr.bf16.mxu0 %v506
        %1026 = vmatmul.mubr.bf16.gmra.mrb[0].mxu0 %v505
        %v1027 = vpop.f32.mrb[0].mxu0
        %v1028 = vadd.f32 0.0, %v1027
        %v1029 = vpop.f32.mrb[0].mxu0
        %v1030 = vpop.f32.mrb[0].mxu0
        %v1031 = vadd.f32 0.0, %v1030
        %v1032 = vpop.f32.mrb[0].mxu0
        %1033 = vmatprep.mubr.bf16.mxu0 %v509
        %1034 = vmatmul.mubr.bf16.gmra.mrb[0].mxu0 %v508
        %v1035 = vpop.f32.mrb[0].mxu0
        %v1036 = vadd.f32 0.0, %v1035
        %v1037 = vpop.f32.mrb[0].mxu0
        %v1038 = vpop.f32.mrb[0].mxu0
        %v1039 = vadd.f32 0.0, %v1038
        %v1040 = vpop.f32.mrb[0].mxu0
        %1041 = vmatprep.mubr.bf16.mxu0 %v512
        %1042 = vmatmul.mubr.bf16.gmra.mrb[0].mxu0 %v511
        %v1043 = vpop.f32.mrb[0].mxu0
        %v1044 = vadd.f32 0.0, %v1043
        %v1045 = vpop.f32.mrb[0].mxu0
        %v1046 = vpop.f32.mrb[0].mxu0
        %v1047 = vadd.f32 0.0, %v1046
        %v1048 = vpop.f32.mrb[0].mxu0
        %1049 = vmatprep.mubr.bf16.mxu0 %v515
        %1050 = vmatmul.mubr.bf16.gmra.mrb[0].mxu0 %v514
        %v1051 = vpop.f32.mrb[0].mxu0
        %v1052 = vadd.f32 0.0, %v1051
        %v1053 = vpop.f32.mrb[0].mxu0
        %v1054 = vpop.f32.mrb[0].mxu0
        %v1055 = vadd.f32 0.0, %v1054
        %v1056 = vpop.f32.mrb[0].mxu0
        %1057 = vdwg.mxu0
        %1058 = vmatprep.subr.bf16.mxu0 0
        %1059 = vmatpush1.bf16.msra.mxu0 %v647
        %1060 = vmatprep.subr.bf16.mxu0 0
        %1061 = vmatpush1.bf16.msra.mxu0 %v648
        %1062 = vmatprep.subr.bf16.mxu0 0
        %1063 = vmatpush1.bf16.msra.mxu0 %v767
        %1064 = vmatprep.subr.bf16.mxu0 0
        %1065 = vmatpush1.bf16.msra.mxu0 0
        %1066 = vmatprep.subr.bf16.mxu0 0
        %1067 = vmatpush1.bf16.msra.mxu0 0
        %1068 = vmatprep.subr.bf16.mxu0 0
        %1069 = vmatpush1.bf16.msra.mxu0 0
        %1070 = vmatprep.subr.bf16.mxu0 0
        %1071 = vmatpush1.bf16.msra.mxu0 0
        %1072 = vmatprep.subr.bf16.mxu0 0
        %1073 = vmatpush1.bf16.msra.mxu0 0
        %1074 = vmatprep.subr.bf16.mxu0 0
        %1075 = vmatpush1.bf16.msra.mxu0 0
        %1076 = vmatprep.subr.bf16.mxu0 0
        %1077 = vmatpush1.bf16.msra.mxu0 0
        %1078 = vmatprep.subr.bf16.mxu0 0
        %1079 = vmatpush1.bf16.msra.mxu0 0
        %1080 = vmatprep.subr.bf16.mxu0 0
        %1081 = vmatpush1.bf16.msra.mxu0 0
        %1082 = vmatprep.subr.bf16.mxu0 0
        %1083 = vmatpush1.bf16.msra.mxu0 0
        %1084 = vmatprep.subr.bf16.mxu0 0
        %1085 = vmatpush1.bf16.msra.mxu0 0
        %1086 = vmatprep.subr.bf16.mxu0 0
        %1087 = vmatpush1.bf16.msra.mxu0 0
        %1088 = vmatprep.subr.bf16.mxu0 0
        %1089 = vmatpush1.bf16.msra.mxu0 0
        %1090 = vmatprep.mubr.bf16.mxu0 0
        %1091 = vmatmul.mubr.bf16.gmra.mrb[0].mxu0 %v670
        %v1092 = vpop.f32.mrb[0].mxu0
        %v1093 = vadd.f32 %v804, %v1092
        %v1094 = vpop.f32.mrb[0].mxu0
        %v1095 = vpop.f32.mrb[0].mxu0
        %v1096 = vadd.f32 %v807, %v1095
        %v1097 = vpop.f32.mrb[0].mxu0
        %1098 = vmatprep.mubr.bf16.mxu0 0
        %1099 = vmatmul.mubr.bf16.gmra.mrb[0].mxu0 %v673
        %v1100 = vpop.f32.mrb[0].mxu0
        %v1101 = vadd.f32 %v812, %v1100
        %v1102 = vpop.f32.mrb[0].mxu0
        %v1103 = vpop.f32.mrb[0].mxu0
        %v1104 = vadd.f32 %v815, %v1103
        %v1105 = vpop.f32.mrb[0].mxu0
        %1106 = vmatprep.mubr.bf16.mxu0 0
        %1107 = vmatmul.mubr.bf16.gmra.mrb[0].mxu0 %v676
        %v1108 = vpop.f32.mrb[0].mxu0
        %v1109 = vadd.f32 %v820, %v1108
        %v1110 = vpop.f32.mrb[0].mxu0
        %v1111 = vpop.f32.mrb[0].mxu0
        %v1112 = vadd.f32 %v823, %v1111
        %v1113 = vpop.f32.mrb[0].mxu0
        %1114 = vmatprep.mubr.bf16.mxu0 0
        %1115 = vmatmul.mubr.bf16.gmra.mrb[0].mxu0 %v679
        %v1116 = vpop.f32.mrb[0].mxu0
        %v1117 = vadd.f32 %v828, %v1116
        %v1118 = vpop.f32.mrb[0].mxu0
        %v1119 = vpop.f32.mrb[0].mxu0
        %v1120 = vadd.f32 %v831, %v1119
        %v1121 = vpop.f32.mrb[0].mxu0
        %1122 = vmatprep.mubr.bf16.mxu0 0
        %1123 = vmatmul.mubr.bf16.gmra.mrb[0].mxu0 %v682
        %v1124 = vpop.f32.mrb[0].mxu0
        %v1125 = vadd.f32 %v836, %v1124
        %v1126 = vpop.f32.mrb[0].mxu0
        %v1127 = vpop.f32.mrb[0].mxu0
        %v1128 = vadd.f32 %v839, %v1127
        %v1129 = vpop.f32.mrb[0].mxu0
        %1130 = vmatprep.mubr.bf16.mxu0 0
        %1131 = vmatmul.mubr.bf16.gmra.mrb[0].mxu0 %v685
        %v1132 = vpop.f32.mrb[0].mxu0
        %v1133 = vadd.f32 %v844, %v1132
        %v1134 = vpop.f32.mrb[0].mxu0
        %v1135 = vpop.f32.mrb[0].mxu0
        %v1136 = vadd.f32 %v847, %v1135
        %v1137 = vpop.f32.mrb[0].mxu0
        %1138 = vmatprep.mubr.bf16.mxu0 0
        %1139 = vmatmul.mubr.bf16.gmra.mrb[0].mxu0 %v688
        %v1140 = vpop.f32.mrb[0].mxu0
        %v1141 = vadd.f32 %v852, %v1140
        %v1142 = vpop.f32.mrb[0].mxu0
        %v1143 = vpop.f32.mrb[0].mxu0
        %v1144 = vadd.f32 %v855, %v1143
        %v1145 = vpop.f32.mrb[0].mxu0
        %1146 = vmatprep.mubr.bf16.mxu0 0
        %1147 = vmatmul.mubr.bf16.gmra.mrb[0].mxu0 %v691
        %v1148 = vpop.f32.mrb[0].mxu0
        %v1149 = vadd.f32 %v860, %v1148
        %v1150 = vpop.f32.mrb[0].mxu0
        %v1151 = vpop.f32.mrb[0].mxu0
        %v1152 = vadd.f32 %v863, %v1151
        %v1153 = vpop.f32.mrb[0].mxu0
        %1154 = vmatprep.mubr.bf16.mxu0 0
        %1155 = vmatmul.mubr.bf16.gmra.mrb[0].mxu0 %v694
        %v1156 = vpop.f32.mrb[0].mxu0
        %v1157 = vadd.f32 %v868, %v1156
        %v1158 = vpop.f32.mrb[0].mxu0
        %v1159 = vpop.f32.mrb[0].mxu0
        %v1160 = vadd.f32 %v871, %v1159
        %v1161 = vpop.f32.mrb[0].mxu0
        %1162 = vmatprep.mubr.bf16.mxu0 0
        %1163 = vmatmul.mubr.bf16.gmra.mrb[0].mxu0 %v697
        %v1164 = vpop.f32.mrb[0].mxu0
        %v1165 = vadd.f32 %v876, %v1164
        %v1166 = vpop.f32.mrb[0].mxu0
        %v1167 = vpop.f32.mrb[0].mxu0
        %v1168 = vadd.f32 %v879, %v1167
        %v1169 = vpop.f32.mrb[0].mxu0
        %1170 = vmatprep.mubr.bf16.mxu0 0
        %1171 = vmatmul.mubr.bf16.gmra.mrb[0].mxu0 %v700
        %v1172 = vpop.f32.mrb[0].mxu0
        %v1173 = vadd.f32 %v884, %v1172
        %v1174 = vpop.f32.mrb[0].mxu0
        %v1175 = vpop.f32.mrb[0].mxu0
        %v1176 = vadd.f32 %v887, %v1175
        %v1177 = vpop.f32.mrb[0].mxu0
        %1178 = vmatprep.mubr.bf16.mxu0 0
        %1179 = vmatmul.mubr.bf16.gmra.mrb[0].mxu0 %v703
        %v1180 = vpop.f32.mrb[0].mxu0
        %v1181 = vadd.f32 %v892, %v1180
        %v1182 = vpop.f32.mrb[0].mxu0
        %v1183 = vpop.f32.mrb[0].mxu0
        %v1184 = vadd.f32 %v895, %v1183
        %v1185 = vpop.f32.mrb[0].mxu0
        %1186 = vmatprep.mubr.bf16.mxu0 0
        %1187 = vmatmul.mubr.bf16.gmra.mrb[0].mxu0 %v706
        %v1188 = vpop.f32.mrb[0].mxu0
        %v1189 = vadd.f32 %v900, %v1188
        %v1190 = vpop.f32.mrb[0].mxu0
        %v1191 = vpop.f32.mrb[0].mxu0
        %v1192 = vadd.f32 %v903, %v1191
        %v1193 = vpop.f32.mrb[0].mxu0
        %1194 = vmatprep.mubr.bf16.mxu0 0
        %1195 = vmatmul.mubr.bf16.gmra.mrb[0].mxu0 %v709
        %v1196 = vpop.f32.mrb[0].mxu0
        %v1197 = vadd.f32 %v908, %v1196
        %v1198 = vpop.f32.mrb[0].mxu0
        %v1199 = vpop.f32.mrb[0].mxu0
        %v1200 = vadd.f32 %v911, %v1199
        %v1201 = vpop.f32.mrb[0].mxu0
        %1202 = vmatprep.mubr.bf16.mxu0 0
        %1203 = vmatmul.mubr.bf16.gmra.mrb[0].mxu0 %v712
        %v1204 = vpop.f32.mrb[0].mxu0
        %v1205 = vadd.f32 %v916, %v1204
        %v1206 = vpop.f32.mrb[0].mxu0
        %v1207 = vpop.f32.mrb[0].mxu0
        %v1208 = vadd.f32 %v919, %v1207
        %v1209 = vpop.f32.mrb[0].mxu0
        %1210 = vmatprep.mubr.bf16.mxu0 0
        %1211 = vmatmul.mubr.bf16.gmra.mrb[0].mxu0 %v715
        %v1212 = vpop.f32.mrb[0].mxu0
        %v1213 = vadd.f32 %v924, %v1212
        %v1214 = vpop.f32.mrb[0].mxu0
        %v1215 = vpop.f32.mrb[0].mxu0
        %v1216 = vadd.f32 %v927, %v1215
        %v1217 = vpop.f32.mrb[0].mxu0
        %1218 = vmatprep.mubr.bf16.mxu0 0
        %1219 = vmatmul.mubr.bf16.gmra.mrb[0].mxu0 %v718
        %v1220 = vpop.f32.mrb[0].mxu0
        %v1221 = vadd.f32 %v932, %v1220
        %v1222 = vpop.f32.mrb[0].mxu0
        %v1223 = vpop.f32.mrb[0].mxu0
        %v1224 = vadd.f32 %v935, %v1223
        %v1225 = vpop.f32.mrb[0].mxu0
        %1226 = vmatprep.mubr.bf16.mxu0 0
        %1227 = vmatmul.mubr.bf16.gmra.mrb[0].mxu0 %v721
        %v1228 = vpop.f32.mrb[0].mxu0
        %v1229 = vadd.f32 %v940, %v1228
        %v1230 = vpop.f32.mrb[0].mxu0
        %v1231 = vpop.f32.mrb[0].mxu0
        %v1232 = vadd.f32 %v943, %v1231
        %v1233 = vpop.f32.mrb[0].mxu0
        %1234 = vmatprep.mubr.bf16.mxu0 0
        %1235 = vmatmul.mubr.bf16.gmra.mrb[0].mxu0 %v724
        %v1236 = vpop.f32.mrb[0].mxu0
        %v1237 = vadd.f32 %v948, %v1236
        %v1238 = vpop.f32.mrb[0].mxu0
        %v1239 = vpop.f32.mrb[0].mxu0
        %v1240 = vadd.f32 %v951, %v1239
        %v1241 = vpop.f32.mrb[0].mxu0
        %1242 = vmatprep.mubr.bf16.mxu0 0
        %1243 = vmatmul.mubr.bf16.gmra.mrb[0].mxu0 %v727
        %v1244 = vpop.f32.mrb[0].mxu0
        %v1245 = vadd.f32 %v956, %v1244
        %v1246 = vpop.f32.mrb[0].mxu0
        %v1247 = vpop.f32.mrb[0].mxu0
        %v1248 = vadd.f32 %v959, %v1247
        %v1249 = vpop.f32.mrb[0].mxu0
        %1250 = vmatprep.mubr.bf16.mxu0 0
        %1251 = vmatmul.mubr.bf16.gmra.mrb[0].mxu0 %v730
        %v1252 = vpop.f32.mrb[0].mxu0
        %v1253 = vadd.f32 %v964, %v1252
        %v1254 = vpop.f32.mrb[0].mxu0
        %v1255 = vpop.f32.mrb[0].mxu0
        %v1256 = vadd.f32 %v967, %v1255
        %v1257 = vpop.f32.mrb[0].mxu0
        %1258 = vmatprep.mubr.bf16.mxu0 0
        %1259 = vmatmul.mubr.bf16.gmra.mrb[0].mxu0 %v733
        %v1260 = vpop.f32.mrb[0].mxu0
        %v1261 = vadd.f32 %v972, %v1260
        %v1262 = vpop.f32.mrb[0].mxu0
        %v1263 = vpop.f32.mrb[0].mxu0
        %v1264 = vadd.f32 %v975, %v1263
        %v1265 = vpop.f32.mrb[0].mxu0
        %1266 = vmatprep.mubr.bf16.mxu0 0
        %1267 = vmatmul.mubr.bf16.gmra.mrb[0].mxu0 %v736
        %v1268 = vpop.f32.mrb[0].mxu0
        %v1269 = vadd.f32 %v980, %v1268
        %v1270 = vpop.f32.mrb[0].mxu0
        %v1271 = vpop.f32.mrb[0].mxu0
        %v1272 = vadd.f32 %v983, %v1271
        %v1273 = vpop.f32.mrb[0].mxu0
        %1274 = vmatprep.mubr.bf16.mxu0 0
        %1275 = vmatmul.mubr.bf16.gmra.mrb[0].mxu0 %v739
        %v1276 = vpop.f32.mrb[0].mxu0
        %v1277 = vadd.f32 %v988, %v1276
        %v1278 = vpop.f32.mrb[0].mxu0
        %v1279 = vpop.f32.mrb[0].mxu0
        %v1280 = vadd.f32 %v991, %v1279
        %v1281 = vpop.f32.mrb[0].mxu0
        %1282 = vmatprep.mubr.bf16.mxu0 0
        %1283 = vmatmul.mubr.bf16.gmra.mrb[0].mxu0 %v742
        %v1284 = vpop.f32.mrb[0].mxu0
        %v1285 = vadd.f32 %v996, %v1284
        %v1286 = vpop.f32.mrb[0].mxu0
        %v1287 = vpop.f32.mrb[0].mxu0
        %v1288 = vadd.f32 %v999, %v1287
        %v1289 = vpop.f32.mrb[0].mxu0
        %1290 = vmatprep.mubr.bf16.mxu0 0
        %1291 = vmatmul.mubr.bf16.gmra.mrb[0].mxu0 %v745
        %v1292 = vpop.f32.mrb[0].mxu0
        %v1293 = vadd.f32 %v1004, %v1292
        %v1294 = vpop.f32.mrb[0].mxu0
        %v1295 = vpop.f32.mrb[0].mxu0
        %v1296 = vadd.f32 %v1007, %v1295
        %v1297 = vpop.f32.mrb[0].mxu0
        %1298 = vmatprep.mubr.bf16.mxu0 0
        %1299 = vmatmul.mubr.bf16.gmra.mrb[0].mxu0 %v748
        %v1300 = vpop.f32.mrb[0].mxu0
        %v1301 = vadd.f32 %v1012, %v1300
        %v1302 = vpop.f32.mrb[0].mxu0
        %v1303 = vpop.f32.mrb[0].mxu0
        %v1304 = vadd.f32 %v1015, %v1303
        %v1305 = vpop.f32.mrb[0].mxu0
        %1306 = vmatprep.mubr.bf16.mxu0 0
        %1307 = vmatmul.mubr.bf16.gmra.mrb[0].mxu0 %v751
        %v1308 = vpop.f32.mrb[0].mxu0
        %v1309 = vadd.f32 %v1020, %v1308
        %v1310 = vpop.f32.mrb[0].mxu0
        %v1311 = vpop.f32.mrb[0].mxu0
        %v1312 = vadd.f32 %v1023, %v1311
        %v1313 = vpop.f32.mrb[0].mxu0
        %1314 = vmatprep.mubr.bf16.mxu0 0
        %1315 = vmatmul.mubr.bf16.gmra.mrb[0].mxu0 %v754
        %v1316 = vpop.f32.mrb[0].mxu0
        %v1317 = vadd.f32 %v1028, %v1316
        %v1318 = vpop.f32.mrb[0].mxu0
        %v1319 = vpop.f32.mrb[0].mxu0
        %v1320 = vadd.f32 %v1031, %v1319
        %v1321 = vpop.f32.mrb[0].mxu0
        %1322 = vmatprep.mubr.bf16.mxu0 0
        %1323 = vmatmul.mubr.bf16.gmra.mrb[0].mxu0 %v757
        %v1324 = vpop.f32.mrb[0].mxu0
        %v1325 = vadd.f32 %v1036, %v1324
        %v1326 = vpop.f32.mrb[0].mxu0
        %v1327 = vpop.f32.mrb[0].mxu0
        %v1328 = vadd.f32 %v1039, %v1327
        %v1329 = vpop.f32.mrb[0].mxu0
        %1330 = vmatprep.mubr.bf16.mxu0 0
        %1331 = vmatmul.mubr.bf16.gmra.mrb[0].mxu0 %v760
        %v1332 = vpop.f32.mrb[0].mxu0
        %v1333 = vadd.f32 %v1044, %v1332
        %v1334 = vpop.f32.mrb[0].mxu0
        %v1335 = vpop.f32.mrb[0].mxu0
        %v1336 = vadd.f32 %v1047, %v1335
        %v1337 = vpop.f32.mrb[0].mxu0
        %1338 = vmatprep.mubr.bf16.mxu0 0
        %1339 = vmatmul.mubr.bf16.gmra.mrb[0].mxu0 %v763
        %v1340 = vpop.f32.mrb[0].mxu0
        %v1341 = vadd.f32 %v1052, %v1340
        %v1342 = vpop.f32.mrb[0].mxu0
        %v1343 = vpop.f32.mrb[0].mxu0
        %v1344 = vadd.f32 %v1055, %v1343
        %v1345 = vpop.f32.mrb[0].mxu0
        %1346 = vdwg.mxu0
        %vm1411 = vcmask 1046528
        %v1412 = vrot.slane %v1093, 1
        %v1413 = vrot.slane %v1096, 1
        %v1414 = vsel %vm1411, %v1412, %v1413
        %v1415 = vrot.slane %v1101, 1
        %v1416 = vsel %vm1411, %v1413, %v1415
        %v1417 = vrot.slane %v1104, 1
        %v1418 = vsel %vm1411, %v1415, %v1417
        %v1419 = vrot.slane %v1109, 1
        %v1420 = vsel %vm1411, %v1417, %v1419
        %v1421 = vrot.slane %v1112, 1
        %v1422 = vsel %vm1411, %v1419, %v1421
        %v1423 = vrot.slane %v1117, 1
        %v1424 = vsel %vm1411, %v1421, %v1423
        %v1425 = vrot.slane %v1120, 1
        %v1426 = vsel %vm1411, %v1423, %v1425
        %v1427 = vrot.slane %v1125, 1
        %v1428 = vrot.slane %v1128, 1
        %v1429 = vsel %vm1411, %v1427, %v1428
        %v1430 = vrot.slane %v1133, 1
        %v1431 = vsel %vm1411, %v1428, %v1430
        %v1432 = vrot.slane %v1136, 1
        %v1433 = vsel %vm1411, %v1430, %v1432
        %v1434 = vrot.slane %v1141, 1
        %v1435 = vsel %vm1411, %v1432, %v1434
        %v1436 = vrot.slane %v1144, 1
        %v1437 = vsel %vm1411, %v1434, %v1436
        %v1438 = vrot.slane %v1149, 1
        %v1439 = vsel %vm1411, %v1436, %v1438
        %v1440 = vrot.slane %v1152, 1
        %v1441 = vsel %vm1411, %v1438, %v1440
        %v1442 = vrot.slane %v1157, 1
        %v1443 = vrot.slane %v1160, 1
        %v1444 = vsel %vm1411, %v1442, %v1443
        %v1445 = vrot.slane %v1165, 1
        %v1446 = vsel %vm1411, %v1443, %v1445
        %v1447 = vrot.slane %v1168, 1
        %v1448 = vsel %vm1411, %v1445, %v1447
        %v1449 = vrot.slane %v1173, 1
        %v1450 = vsel %vm1411, %v1447, %v1449
        %v1451 = vrot.slane %v1176, 1
        %v1452 = vsel %vm1411, %v1449, %v1451
        %v1453 = vrot.slane %v1181, 1
        %v1454 = vsel %vm1411, %v1451, %v1453
        %v1455 = vrot.slane %v1184, 1
        %v1456 = vsel %vm1411, %v1453, %v1455
        %v1457 = vrot.slane %v1189, 1
        %v1458 = vrot.slane %v1192, 1
        %v1459 = vsel %vm1411, %v1457, %v1458
        %v1460 = vrot.slane %v1197, 1
        %v1461 = vsel %vm1411, %v1458, %v1460
        %v1462 = vrot.slane %v1200, 1
        %v1463 = vsel %vm1411, %v1460, %v1462
        %v1464 = vrot.slane %v1205, 1
        %v1465 = vsel %vm1411, %v1462, %v1464
        %v1466 = vrot.slane %v1208, 1
        %v1467 = vsel %vm1411, %v1464, %v1466
        %v1468 = vrot.slane %v1213, 1
        %v1469 = vsel %vm1411, %v1466, %v1468
        %v1470 = vrot.slane %v1216, 1
        %v1471 = vsel %vm1411, %v1468, %v1470
        %v1472 = vrot.slane %v1221, 1
        %v1473 = vrot.slane %v1224, 1
        %v1474 = vsel %vm1411, %v1472, %v1473
        %v1475 = vrot.slane %v1229, 1
        %v1476 = vsel %vm1411, %v1473, %v1475
        %v1477 = vrot.slane %v1232, 1
        %v1478 = vsel %vm1411, %v1475, %v1477
        %v1479 = vrot.slane %v1237, 1
        %v1480 = vsel %vm1411, %v1477, %v1479
        %v1481 = vrot.slane %v1240, 1
        %v1482 = vsel %vm1411, %v1479, %v1481
        %v1483 = vrot.slane %v1245, 1
        %v1484 = vsel %vm1411, %v1481, %v1483
        %v1485 = vrot.slane %v1248, 1
        %v1486 = vsel %vm1411, %v1483, %v1485
        %v1487 = vrot.slane %v1253, 1
        %v1488 = vrot.slane %v1256, 1
        %v1489 = vsel %vm1411, %v1487, %v1488
        %v1490 = vrot.slane %v1261, 1
        %v1491 = vsel %vm1411, %v1488, %v1490
        %v1492 = vrot.slane %v1264, 1
        %v1493 = vsel %vm1411, %v1490, %v1492
        %v1494 = vrot.slane %v1269, 1
        %v1495 = vsel %vm1411, %v1492, %v1494
        %v1496 = vrot.slane %v1272, 1
        %v1497 = vsel %vm1411, %v1494, %v1496
        %v1498 = vrot.slane %v1277, 1
        %v1499 = vsel %vm1411, %v1496, %v1498
        %v1500 = vrot.slane %v1280, 1
        %v1501 = vsel %vm1411, %v1498, %v1500
        %v1502 = vrot.slane %v1285, 1
        %v1503 = vrot.slane %v1288, 1
        %v1504 = vsel %vm1411, %v1502, %v1503
        %v1505 = vrot.slane %v1293, 1
        %v1506 = vsel %vm1411, %v1503, %v1505
        %v1507 = vrot.slane %v1296, 1
        %v1508 = vsel %vm1411, %v1505, %v1507
        %v1509 = vrot.slane %v1301, 1
        %v1510 = vsel %vm1411, %v1507, %v1509
        %v1511 = vrot.slane %v1304, 1
        %v1512 = vsel %vm1411, %v1509, %v1511
        %v1513 = vrot.slane %v1309, 1
        %v1514 = vsel %vm1411, %v1511, %v1513
        %v1515 = vrot.slane %v1312, 1
        %v1516 = vsel %vm1411, %v1513, %v1515
        %v1517 = vrot.slane %v1317, 1
        %v1518 = vrot.slane %v1320, 1
        %v1519 = vsel %vm1411, %v1517, %v1518
        %v1520 = vrot.slane %v1325, 1
        %v1521 = vsel %vm1411, %v1518, %v1520
        %v1522 = vrot.slane %v1328, 1
        %v1523 = vsel %vm1411, %v1520, %v1522
        %v1524 = vrot.slane %v1333, 1
        %v1525 = vsel %vm1411, %v1522, %v1524
        %v1526 = vrot.slane %v1336, 1
        %v1527 = vsel %vm1411, %v1524, %v1526
        %v1528 = vrot.slane %v1341, 1
        %v1529 = vsel %vm1411, %v1526, %v1528
        %v1530 = vrot.slane %v1344, 1
        %v1531 = vsel %vm1411, %v1528, %v1530
        %1532 = vrot.lane.b32.xlu0 %v1414, 120
        %v1533 = vpop.permute.xlu0 %1532
        %1534 = vrot.lane.b32.xlu0 %v1416, 120
        %v1535 = vpop.permute.xlu0 %1534
        %1536 = vrot.lane.b32.xlu0 %v1418, 120
        %v1537 = vpop.permute.xlu0 %1536
        %1538 = vrot.lane.b32.xlu0 %v1420, 120
        %v1539 = vpop.permute.xlu0 %1538
        %1540 = vrot.lane.b32.xlu0 %v1422, 120
        %v1541 = vpop.permute.xlu0 %1540
        %1542 = vrot.lane.b32.xlu0 %v1424, 120
        %v1543 = vpop.permute.xlu0 %1542
        %1544 = vrot.lane.b32.xlu0 %v1426, 120
        %v1545 = vpop.permute.xlu0 %1544
        %1546 = vrot.lane.b32.xlu0 %v1425, 120
        %v1547 = vpop.permute.xlu0 %1546
        %1548 = vrot.lane.b32.xlu0 %v1429, 120
        %v1549 = vpop.permute.xlu0 %1548
        %1550 = vrot.lane.b32.xlu0 %v1431, 120
        %v1551 = vpop.permute.xlu0 %1550
        %1552 = vrot.lane.b32.xlu0 %v1433, 120
        %v1553 = vpop.permute.xlu0 %1552
        %1554 = vrot.lane.b32.xlu0 %v1435, 120
        %v1555 = vpop.permute.xlu0 %1554
        %1556 = vrot.lane.b32.xlu0 %v1437, 120
        %v1557 = vpop.permute.xlu0 %1556
        %1558 = vrot.lane.b32.xlu0 %v1439, 120
        %v1559 = vpop.permute.xlu0 %1558
        %1560 = vrot.lane.b32.xlu0 %v1441, 120
        %v1561 = vpop.permute.xlu0 %1560
        %1562 = vrot.lane.b32.xlu0 %v1440, 120
        %v1563 = vpop.permute.xlu0 %1562
        %1564 = vrot.lane.b32.xlu0 %v1444, 120
        %v1565 = vpop.permute.xlu0 %1564
        %1566 = vrot.lane.b32.xlu0 %v1446, 120
        %v1567 = vpop.permute.xlu0 %1566
        %1568 = vrot.lane.b32.xlu0 %v1448, 120
        %v1569 = vpop.permute.xlu0 %1568
        %1570 = vrot.lane.b32.xlu0 %v1450, 120
        %v1571 = vpop.permute.xlu0 %1570
        %1572 = vrot.lane.b32.xlu0 %v1452, 120
        %v1573 = vpop.permute.xlu0 %1572
        %1574 = vrot.lane.b32.xlu0 %v1454, 120
        %v1575 = vpop.permute.xlu0 %1574
        %1576 = vrot.lane.b32.xlu0 %v1456, 120
        %v1577 = vpop.permute.xlu0 %1576
        %1578 = vrot.lane.b32.xlu0 %v1455, 120
        %v1579 = vpop.permute.xlu0 %1578
        %1580 = vrot.lane.b32.xlu0 %v1459, 120
        %v1581 = vpop.permute.xlu0 %1580
        %1582 = vrot.lane.b32.xlu0 %v1461, 120
        %v1583 = vpop.permute.xlu0 %1582
        %1584 = vrot.lane.b32.xlu0 %v1463, 120
        %v1585 = vpop.permute.xlu0 %1584
        %1586 = vrot.lane.b32.xlu0 %v1465, 120
        %v1587 = vpop.permute.xlu0 %1586
        %1588 = vrot.lane.b32.xlu0 %v1467, 120
        %v1589 = vpop.permute.xlu0 %1588
        %1590 = vrot.lane.b32.xlu0 %v1469, 120
        %v1591 = vpop.permute.xlu0 %1590
        %1592 = vrot.lane.b32.xlu0 %v1471, 120
        %v1593 = vpop.permute.xlu0 %1592
        %1594 = vrot.lane.b32.xlu0 %v1470, 120
        %v1595 = vpop.permute.xlu0 %1594
        %1596 = vrot.lane.b32.xlu0 %v1474, 120
        %v1597 = vpop.permute.xlu0 %1596
        %1598 = vrot.lane.b32.xlu0 %v1476, 120
        %v1599 = vpop.permute.xlu0 %1598
        %1600 = vrot.lane.b32.xlu0 %v1478, 120
        %v1601 = vpop.permute.xlu0 %1600
        %1602 = vrot.lane.b32.xlu0 %v1480, 120
        %v1603 = vpop.permute.xlu0 %1602
        %1604 = vrot.lane.b32.xlu0 %v1482, 120
        %v1605 = vpop.permute.xlu0 %1604
        %1606 = vrot.lane.b32.xlu0 %v1484, 120
        %v1607 = vpop.permute.xlu0 %1606
        %1608 = vrot.lane.b32.xlu0 %v1486, 120
        %v1609 = vpop.permute.xlu0 %1608
        %1610 = vrot.lane.b32.xlu0 %v1485, 120
        %v1611 = vpop.permute.xlu0 %1610
        %1612 = vrot.lane.b32.xlu0 %v1489, 120
        %v1613 = vpop.permute.xlu0 %1612
        %1614 = vrot.lane.b32.xlu0 %v1491, 120
        %v1615 = vpop.permute.xlu0 %1614
        %1616 = vrot.lane.b32.xlu0 %v1493, 120
        %v1617 = vpop.permute.xlu0 %1616
        %1618 = vrot.lane.b32.xlu0 %v1495, 120
        %v1619 = vpop.permute.xlu0 %1618
        %1620 = vrot.lane.b32.xlu0 %v1497, 120
        %v1621 = vpop.permute.xlu0 %1620
        %1622 = vrot.lane.b32.xlu0 %v1499, 120
        %v1623 = vpop.permute.xlu0 %1622
        %1624 = vrot.lane.b32.xlu0 %v1501, 120
        %v1625 = vpop.permute.xlu0 %1624
        %1626 = vrot.lane.b32.xlu0 %v1500, 120
        %v1627 = vpop.permute.xlu0 %1626
        %1628 = vrot.lane.b32.xlu0 %v1504, 120
        %v1629 = vpop.permute.xlu0 %1628
        %1630 = vrot.lane.b32.xlu0 %v1506, 120
        %v1631 = vpop.permute.xlu0 %1630
        %1632 = vrot.lane.b32.xlu0 %v1508, 120
        %v1633 = vpop.permute.xlu0 %1632
        %1634 = vrot.lane.b32.xlu0 %v1510, 120
        %v1635 = vpop.permute.xlu0 %1634
        %1636 = vrot.lane.b32.xlu0 %v1512, 120
        %v1637 = vpop.permute.xlu0 %1636
        %1638 = vrot.lane.b32.xlu0 %v1514, 120
        %v1639 = vpop.permute.xlu0 %1638
        %1640 = vrot.lane.b32.xlu0 %v1516, 120
        %v1641 = vpop.permute.xlu0 %1640
        %1642 = vrot.lane.b32.xlu0 %v1515, 120
        %v1643 = vpop.permute.xlu0 %1642
        %1644 = vrot.lane.b32.xlu0 %v1519, 120
        %v1645 = vpop.permute.xlu0 %1644
        %1646 = vrot.lane.b32.xlu0 %v1521, 120
        %v1647 = vpop.permute.xlu0 %1646
        %1648 = vrot.lane.b32.xlu0 %v1523, 120
        %v1649 = vpop.permute.xlu0 %1648
        %1650 = vrot.lane.b32.xlu0 %v1525, 120
        %v1651 = vpop.permute.xlu0 %1650
        %1652 = vrot.lane.b32.xlu0 %v1527, 120
        %v1653 = vpop.permute.xlu0 %1652
        %1654 = vrot.lane.b32.xlu0 %v1529, 120
        %v1655 = vpop.permute.xlu0 %1654
        %1656 = vrot.lane.b32.xlu0 %v1531, 120
        %v1657 = vpop.permute.xlu0 %1656
        %1658 = vrot.lane.b32.xlu0 %v1530, 120
        %v1659 = vpop.permute.xlu0 %1658
        %v1724 = vadd.f32 %v1093, %v1533
        %v1725 = vadd.f32 %v1096, %v1535
        %v1726 = vadd.f32 %v1101, %v1537
        %v1727 = vadd.f32 %v1104, %v1539
        %v1728 = vadd.f32 %v1109, %v1541
        %v1729 = vadd.f32 %v1112, %v1543
        %v1730 = vadd.f32 %v1117, %v1545
        %v1731 = vadd.f32 %v1120, %v1547
        %v1732 = vadd.f32 %v1125, %v1549
        %v1733 = vadd.f32 %v1128, %v1551
        %v1734 = vadd.f32 %v1133, %v1553
        %v1735 = vadd.f32 %v1136, %v1555
        %v1736 = vadd.f32 %v1141, %v1557
        %v1737 = vadd.f32 %v1144, %v1559
        %v1738 = vadd.f32 %v1149, %v1561
        %v1739 = vadd.f32 %v1152, %v1563
        %v1740 = vadd.f32 %v1157, %v1565
        %v1741 = vadd.f32 %v1160, %v1567
        %v1742 = vadd.f32 %v1165, %v1569
        %v1743 = vadd.f32 %v1168, %v1571
        %v1744 = vadd.f32 %v1173, %v1573
        %v1745 = vadd.f32 %v1176, %v1575
        %v1746 = vadd.f32 %v1181, %v1577
        %v1747 = vadd.f32 %v1184, %v1579
        %v1748 = vadd.f32 %v1189, %v1581
        %v1749 = vadd.f32 %v1192, %v1583
        %v1750 = vadd.f32 %v1197, %v1585
        %v1751 = vadd.f32 %v1200, %v1587
        %v1752 = vadd.f32 %v1205, %v1589
        %v1753 = vadd.f32 %v1208, %v1591
        %v1754 = vadd.f32 %v1213, %v1593
        %v1755 = vadd.f32 %v1216, %v1595
        %v1756 = vadd.f32 %v1221, %v1597
        %v1757 = vadd.f32 %v1224, %v1599
        %v1758 = vadd.f32 %v1229, %v1601
        %v1759 = vadd.f32 %v1232, %v1603
        %v1760 = vadd.f32 %v1237, %v1605
        %v1761 = vadd.f32 %v1240, %v1607
        %v1762 = vadd.f32 %v1245, %v1609
        %v1763 = vadd.f32 %v1248, %v1611
        %v1764 = vadd.f32 %v1253, %v1613
        %v1765 = vadd.f32 %v1256, %v1615
        %v1766 = vadd.f32 %v1261, %v1617
        %v1767 = vadd.f32 %v1264, %v1619
        %v1768 = vadd.f32 %v1269, %v1621
        %v1769 = vadd.f32 %v1272, %v1623
        %v1770 = vadd.f32 %v1277, %v1625
        %v1771 = vadd.f32 %v1280, %v1627
        %v1772 = vadd.f32 %v1285, %v1629
        %v1773 = vadd.f32 %v1288, %v1631
        %v1774 = vadd.f32 %v1293, %v1633
        %v1775 = vadd.f32 %v1296, %v1635
        %v1776 = vadd.f32 %v1301, %v1637
        %v1777 = vadd.f32 %v1304, %v1639
        %v1778 = vadd.f32 %v1309, %v1641
        %v1779 = vadd.f32 %v1312, %v1643
        %v1780 = vadd.f32 %v1317, %v1645
        %v1781 = vadd.f32 %v1320, %v1647
        %v1782 = vadd.f32 %v1325, %v1649
        %v1783 = vadd.f32 %v1328, %v1651
        %v1784 = vadd.f32 %v1333, %v1653
        %v1785 = vadd.f32 %v1336, %v1655
        %v1786 = vadd.f32 %v1341, %v1657
        %v1787 = vadd.f32 %v1344, %v1659
        %v1788 = vrot.slane %v1093, 2
        %v1789 = vrot.slane %v1096, 2
        %v1790 = vsel %vm765, %v1788, %v1789
        %v1791 = vrot.slane %v1101, 2
        %v1792 = vsel %vm765, %v1789, %v1791
        %v1793 = vrot.slane %v1104, 2
        %v1794 = vsel %vm765, %v1791, %v1793
        %v1795 = vrot.slane %v1109, 2
        %v1796 = vsel %vm765, %v1793, %v1795
        %v1797 = vrot.slane %v1112, 2
        %v1798 = vsel %vm765, %v1795, %v1797
        %v1799 = vrot.slane %v1117, 2
        %v1800 = vsel %vm765, %v1797, %v1799
        %v1801 = vrot.slane %v1120, 2
        %v1802 = vsel %vm765, %v1799, %v1801
        %v1803 = vrot.slane %v1125, 2
        %v1804 = vrot.slane %v1128, 2
        %v1805 = vsel %vm765, %v1803, %v1804
        %v1806 = vrot.slane %v1133, 2
        %v1807 = vsel %vm765, %v1804, %v1806
        %v1808 = vrot.slane %v1136, 2
        %v1809 = vsel %vm765, %v1806, %v1808
        %v1810 = vrot.slane %v1141, 2
        %v1811 = vsel %vm765, %v1808, %v1810
        %v1812 = vrot.slane %v1144, 2
        %v1813 = vsel %vm765, %v1810, %v1812
        %v1814 = vrot.slane %v1149, 2
        %v1815 = vsel %vm765, %v1812, %v1814
        %v1816 = vrot.slane %v1152, 2
        %v1817 = vsel %vm765, %v1814, %v1816
        %v1818 = vrot.slane %v1157, 2
        %v1819 = vrot.slane %v1160, 2
        %v1820 = vsel %vm765, %v1818, %v1819
        %v1821 = vrot.slane %v1165, 2
        %v1822 = vsel %vm765, %v1819, %v1821
        %v1823 = vrot.slane %v1168, 2
        %v1824 = vsel %vm765, %v1821, %v1823
        %v1825 = vrot.slane %v1173, 2
        %v1826 = vsel %vm765, %v1823, %v1825
        %v1827 = vrot.slane %v1176, 2
        %v1828 = vsel %vm765, %v1825, %v1827
        %v1829 = vrot.slane %v1181, 2
        %v1830 = vsel %vm765, %v1827, %v1829
        %v1831 = vrot.slane %v1184, 2
        %v1832 = vsel %vm765, %v1829, %v1831
        %v1833 = vrot.slane %v1189, 2
        %v1834 = vrot.slane %v1192, 2
        %v1835 = vsel %vm765, %v1833, %v1834
        %v1836 = vrot.slane %v1197, 2
        %v1837 = vsel %vm765, %v1834, %v1836
        %v1838 = vrot.slane %v1200, 2
        %v1839 = vsel %vm765, %v1836, %v1838
        %v1840 = vrot.slane %v1205, 2
        %v1841 = vsel %vm765, %v1838, %v1840
        %v1842 = vrot.slane %v1208, 2
        %v1843 = vsel %vm765, %v1840, %v1842
        %v1844 = vrot.slane %v1213, 2
        %v1845 = vsel %vm765, %v1842, %v1844
        %v1846 = vrot.slane %v1216, 2
        %v1847 = vsel %vm765, %v1844, %v1846
        %v1848 = vrot.slane %v1221, 2
        %v1849 = vrot.slane %v1224, 2
        %v1850 = vsel %vm765, %v1848, %v1849
        %v1851 = vrot.slane %v1229, 2
        %v1852 = vsel %vm765, %v1849, %v1851
        %v1853 = vrot.slane %v1232, 2
        %v1854 = vsel %vm765, %v1851, %v1853
        %v1855 = vrot.slane %v1237, 2
        %v1856 = vsel %vm765, %v1853, %v1855
        %v1857 = vrot.slane %v1240, 2
        %v1858 = vsel %vm765, %v1855, %v1857
        %v1859 = vrot.slane %v1245, 2
        %v1860 = vsel %vm765, %v1857, %v1859
        %v1861 = vrot.slane %v1248, 2
        %v1862 = vsel %vm765, %v1859, %v1861
        %v1863 = vrot.slane %v1253, 2
        %v1864 = vrot.slane %v1256, 2
        %v1865 = vsel %vm765, %v1863, %v1864
        %v1866 = vrot.slane %v1261, 2
        %v1867 = vsel %vm765, %v1864, %v1866
        %v1868 = vrot.slane %v1264, 2
        %v1869 = vsel %vm765, %v1866, %v1868
        %v1870 = vrot.slane %v1269, 2
        %v1871 = vsel %vm765, %v1868, %v1870
        %v1872 = vrot.slane %v1272, 2
        %v1873 = vsel %vm765, %v1870, %v1872
        %v1874 = vrot.slane %v1277, 2
        %v1875 = vsel %vm765, %v1872, %v1874
        %v1876 = vrot.slane %v1280, 2
        %v1877 = vsel %vm765, %v1874, %v1876
        %v1878 = vrot.slane %v1285, 2
        %v1879 = vrot.slane %v1288, 2
        %v1880 = vsel %vm765, %v1878, %v1879
        %v1881 = vrot.slane %v1293, 2
        %v1882 = vsel %vm765, %v1879, %v1881
        %v1883 = vrot.slane %v1296, 2
        %v1884 = vsel %vm765, %v1881, %v1883
        %v1885 = vrot.slane %v1301, 2
        %v1886 = vsel %vm765, %v1883, %v1885
        %v1887 = vrot.slane %v1304, 2
        %v1888 = vsel %vm765, %v1885, %v1887
        %v1889 = vrot.slane %v1309, 2
        %v1890 = vsel %vm765, %v1887, %v1889
        %v1891 = vrot.slane %v1312, 2
        %v1892 = vsel %vm765, %v1889, %v1891
        %v1893 = vrot.slane %v1317, 2
        %v1894 = vrot.slane %v1320, 2
        %v1895 = vsel %vm765, %v1893, %v1894
        %v1896 = vrot.slane %v1325, 2
        %v1897 = vsel %vm765, %v1894, %v1896
        %v1898 = vrot.slane %v1328, 2
        %v1899 = vsel %vm765, %v1896, %v1898
        %v1900 = vrot.slane %v1333, 2
        %v1901 = vsel %vm765, %v1898, %v1900
        %v1902 = vrot.slane %v1336, 2
        %v1903 = vsel %vm765, %v1900, %v1902
        %v1904 = vrot.slane %v1341, 2
        %v1905 = vsel %vm765, %v1902, %v1904
        %v1906 = vrot.slane %v1344, 2
        %v1907 = vsel %vm765, %v1904, %v1906
        %1908 = vrot.lane.b32.xlu0 %v1790, 112
        %v1909 = vpop.permute.xlu0 %1908
        %1910 = vrot.lane.b32.xlu0 %v1792, 112
        %v1911 = vpop.permute.xlu0 %1910
        %1912 = vrot.lane.b32.xlu0 %v1794, 112
        %v1913 = vpop.permute.xlu0 %1912
        %1914 = vrot.lane.b32.xlu0 %v1796, 112
        %v1915 = vpop.permute.xlu0 %1914
        %1916 = vrot.lane.b32.xlu0 %v1798, 112
        %v1917 = vpop.permute.xlu0 %1916
        %1918 = vrot.lane.b32.xlu0 %v1800, 112
        %v1919 = vpop.permute.xlu0 %1918
        %1920 = vrot.lane.b32.xlu0 %v1802, 112
        %v1921 = vpop.permute.xlu0 %1920
        %1922 = vrot.lane.b32.xlu0 %v1801, 112
        %v1923 = vpop.permute.xlu0 %1922
        %1924 = vrot.lane.b32.xlu0 %v1805, 112
        %v1925 = vpop.permute.xlu0 %1924
        %1926 = vrot.lane.b32.xlu0 %v1807, 112
        %v1927 = vpop.permute.xlu0 %1926
        %1928 = vrot.lane.b32.xlu0 %v1809, 112
        %v1929 = vpop.permute.xlu0 %1928
        %1930 = vrot.lane.b32.xlu0 %v1811, 112
        %v1931 = vpop.permute.xlu0 %1930
        %1932 = vrot.lane.b32.xlu0 %v1813, 112
        %v1933 = vpop.permute.xlu0 %1932
        %1934 = vrot.lane.b32.xlu0 %v1815, 112
        %v1935 = vpop.permute.xlu0 %1934
        %1936 = vrot.lane.b32.xlu0 %v1817, 112
        %v1937 = vpop.permute.xlu0 %1936
        %1938 = vrot.lane.b32.xlu0 %v1816, 112
        %v1939 = vpop.permute.xlu0 %1938
        %1940 = vrot.lane.b32.xlu0 %v1820, 112
        %v1941 = vpop.permute.xlu0 %1940
        %1942 = vrot.lane.b32.xlu0 %v1822, 112
        %v1943 = vpop.permute.xlu0 %1942
        %1944 = vrot.lane.b32.xlu0 %v1824, 112
        %v1945 = vpop.permute.xlu0 %1944
        %1946 = vrot.lane.b32.xlu0 %v1826, 112
        %v1947 = vpop.permute.xlu0 %1946
        %1948 = vrot.lane.b32.xlu0 %v1828, 112
        %v1949 = vpop.permute.xlu0 %1948
        %1950 = vrot.lane.b32.xlu0 %v1830, 112
        %v1951 = vpop.permute.xlu0 %1950
        %1952 = vrot.lane.b32.xlu0 %v1832, 112
        %v1953 = vpop.permute.xlu0 %1952
        %1954 = vrot.lane.b32.xlu0 %v1831, 112
        %v1955 = vpop.permute.xlu0 %1954
        %1956 = vrot.lane.b32.xlu0 %v1835, 112
        %v1957 = vpop.permute.xlu0 %1956
        %1958 = vrot.lane.b32.xlu0 %v1837, 112
        %v1959 = vpop.permute.xlu0 %1958
        %1960 = vrot.lane.b32.xlu0 %v1839, 112
        %v1961 = vpop.permute.xlu0 %1960
        %1962 = vrot.lane.b32.xlu0 %v1841, 112
        %v1963 = vpop.permute.xlu0 %1962
        %1964 = vrot.lane.b32.xlu0 %v1843, 112
        %v1965 = vpop.permute.xlu0 %1964
        %1966 = vrot.lane.b32.xlu0 %v1845, 112
        %v1967 = vpop.permute.xlu0 %1966
        %1968 = vrot.lane.b32.xlu0 %v1847, 112
        %v1969 = vpop.permute.xlu0 %1968
        %1970 = vrot.lane.b32.xlu0 %v1846, 112
        %v1971 = vpop.permute.xlu0 %1970
        %1972 = vrot.lane.b32.xlu0 %v1850, 112
        %v1973 = vpop.permute.xlu0 %1972
        %1974 = vrot.lane.b32.xlu0 %v1852, 112
        %v1975 = vpop.permute.xlu0 %1974
        %1976 = vrot.lane.b32.xlu0 %v1854, 112
        %v1977 = vpop.permute.xlu0 %1976
        %1978 = vrot.lane.b32.xlu0 %v1856, 112
        %v1979 = vpop.permute.xlu0 %1978
        %1980 = vrot.lane.b32.xlu0 %v1858, 112
        %v1981 = vpop.permute.xlu0 %1980
        %1982 = vrot.lane.b32.xlu0 %v1860, 112
        %v1983 = vpop.permute.xlu0 %1982
        %1984 = vrot.lane.b32.xlu0 %v1862, 112
        %v1985 = vpop.permute.xlu0 %1984
        %1986 = vrot.lane.b32.xlu0 %v1861, 112
        %v1987 = vpop.permute.xlu0 %1986
        %1988 = vrot.lane.b32.xlu0 %v1865, 112
        %v1989 = vpop.permute.xlu0 %1988
        %1990 = vrot.lane.b32.xlu0 %v1867, 112
        %v1991 = vpop.permute.xlu0 %1990
        %1992 = vrot.lane.b32.xlu0 %v1869, 112
        %v1993 = vpop.permute.xlu0 %1992
        %1994 = vrot.lane.b32.xlu0 %v1871, 112
        %v1995 = vpop.permute.xlu0 %1994
        %1996 = vrot.lane.b32.xlu0 %v1873, 112
        %v1997 = vpop.permute.xlu0 %1996
        %1998 = vrot.lane.b32.xlu0 %v1875, 112
        %v1999 = vpop.permute.xlu0 %1998
        %2000 = vrot.lane.b32.xlu0 %v1877, 112
        %v2001 = vpop.permute.xlu0 %2000
        %2002 = vrot.lane.b32.xlu0 %v1876, 112
        %v2003 = vpop.permute.xlu0 %2002
        %2004 = vrot.lane.b32.xlu0 %v1880, 112
        %v2005 = vpop.permute.xlu0 %2004
        %2006 = vrot.lane.b32.xlu0 %v1882, 112
        %v2007 = vpop.permute.xlu0 %2006
        %2008 = vrot.lane.b32.xlu0 %v1884, 112
        %v2009 = vpop.permute.xlu0 %2008
        %2010 = vrot.lane.b32.xlu0 %v1886, 112
        %v2011 = vpop.permute.xlu0 %2010
        %2012 = vrot.lane.b32.xlu0 %v1888, 112
        %v2013 = vpop.permute.xlu0 %2012
        %2014 = vrot.lane.b32.xlu0 %v1890, 112
        %v2015 = vpop.permute.xlu0 %2014
        %2016 = vrot.lane.b32.xlu0 %v1892, 112
        %v2017 = vpop.permute.xlu0 %2016
        %2018 = vrot.lane.b32.xlu0 %v1891, 112
        %v2019 = vpop.permute.xlu0 %2018
        %2020 = vrot.lane.b32.xlu0 %v1895, 112
        %v2021 = vpop.permute.xlu0 %2020
        %2022 = vrot.lane.b32.xlu0 %v1897, 112
        %v2023 = vpop.permute.xlu0 %2022
        %2024 = vrot.lane.b32.xlu0 %v1899, 112
        %v2025 = vpop.permute.xlu0 %2024
        %2026 = vrot.lane.b32.xlu0 %v1901, 112
        %v2027 = vpop.permute.xlu0 %2026
        %2028 = vrot.lane.b32.xlu0 %v1903, 112
        %v2029 = vpop.permute.xlu0 %2028
        %2030 = vrot.lane.b32.xlu0 %v1905, 112
        %v2031 = vpop.permute.xlu0 %2030
        %2032 = vrot.lane.b32.xlu0 %v1907, 112
        %v2033 = vpop.permute.xlu0 %2032
        %2034 = vrot.lane.b32.xlu0 %v1906, 112
        %v2035 = vpop.permute.xlu0 %2034
        %v2100 = vadd.f32 %v1724, %v1909
        %v2101 = vadd.f32 %v1725, %v1911
        %v2102 = vadd.f32 %v1726, %v1913
        %v2103 = vadd.f32 %v1727, %v1915
        %v2104 = vadd.f32 %v1728, %v1917
        %v2105 = vadd.f32 %v1729, %v1919
        %v2106 = vadd.f32 %v1730, %v1921
        %v2107 = vadd.f32 %v1731, %v1923
        %v2108 = vadd.f32 %v1732, %v1925
        %v2109 = vadd.f32 %v1733, %v1927
        %v2110 = vadd.f32 %v1734, %v1929
        %v2111 = vadd.f32 %v1735, %v1931
        %v2112 = vadd.f32 %v1736, %v1933
        %v2113 = vadd.f32 %v1737, %v1935
        %v2114 = vadd.f32 %v1738, %v1937
        %v2115 = vadd.f32 %v1739, %v1939
        %v2116 = vadd.f32 %v1740, %v1941
        %v2117 = vadd.f32 %v1741, %v1943
        %v2118 = vadd.f32 %v1742, %v1945
        %v2119 = vadd.f32 %v1743, %v1947
        %v2120 = vadd.f32 %v1744, %v1949
        %v2121 = vadd.f32 %v1745, %v1951
        %v2122 = vadd.f32 %v1746, %v1953
        %v2123 = vadd.f32 %v1747, %v1955
        %v2124 = vadd.f32 %v1748, %v1957
        %v2125 = vadd.f32 %v1749, %v1959
        %v2126 = vadd.f32 %v1750, %v1961
        %v2127 = vadd.f32 %v1751, %v1963
        %v2128 = vadd.f32 %v1752, %v1965
        %v2129 = vadd.f32 %v1753, %v1967
        %v2130 = vadd.f32 %v1754, %v1969
        %v2131 = vadd.f32 %v1755, %v1971
        %v2132 = vadd.f32 %v1756, %v1973
        %v2133 = vadd.f32 %v1757, %v1975
        %v2134 = vadd.f32 %v1758, %v1977
        %v2135 = vadd.f32 %v1759, %v1979
        %v2136 = vadd.f32 %v1760, %v1981
        %v2137 = vadd.f32 %v1761, %v1983
        %v2138 = vadd.f32 %v1762, %v1985
        %v2139 = vadd.f32 %v1763, %v1987
        %v2140 = vadd.f32 %v1764, %v1989
        %v2141 = vadd.f32 %v1765, %v1991
        %v2142 = vadd.f32 %v1766, %v1993
        %v2143 = vadd.f32 %v1767, %v1995
        %v2144 = vadd.f32 %v1768, %v1997
        %v2145 = vadd.f32 %v1769, %v1999
        %v2146 = vadd.f32 %v1770, %v2001
        %v2147 = vadd.f32 %v1771, %v2003
        %v2148 = vadd.f32 %v1772, %v2005
        %v2149 = vadd.f32 %v1773, %v2007
        %v2150 = vadd.f32 %v1774, %v2009
        %v2151 = vadd.f32 %v1775, %v2011
        %v2152 = vadd.f32 %v1776, %v2013
        %v2153 = vadd.f32 %v1777, %v2015
        %v2154 = vadd.f32 %v1778, %v2017
        %v2155 = vadd.f32 %v1779, %v2019
        %v2156 = vadd.f32 %v1780, %v2021
        %v2157 = vadd.f32 %v1781, %v2023
        %v2158 = vadd.f32 %v1782, %v2025
        %v2159 = vadd.f32 %v1783, %v2027
        %v2160 = vadd.f32 %v1784, %v2029
        %v2161 = vadd.f32 %v1785, %v2031
        %v2162 = vadd.f32 %v1786, %v2033
        %v2163 = vadd.f32 %v1787, %v2035
        %vm2164 = vcmask 64512
        %v2165 = vsel %vm2164, %v2100, -inf
        %v2166 = vsel %vm2164, %v2101, -inf
        %v2167 = vmax.f32 %v2165, %v2166
        %v2168 = vsel %vm2164, %v2102, -inf
        %v2169 = vmax.f32 %v2167, %v2168
        %v2170 = vsel %vm2164, %v2103, -inf
        %v2171 = vmax.f32 %v2169, %v2170
        %v2172 = vsel %vm2164, %v2104, -inf
        %v2173 = vmax.f32 %v2171, %v2172
        %v2174 = vsel %vm2164, %v2105, -inf
        %v2175 = vmax.f32 %v2173, %v2174
        %v2176 = vsel %vm2164, %v2106, -inf
        %v2177 = vmax.f32 %v2175, %v2176
        %vm2178 = vcmask 62464
        %v2179 = vsel %vm2178, %v2107, -inf
        %v2180 = vmax.f32 %v2177, %v2179
        %v2181 = vrot.slane %v2180, 4
        %v2182 = vmax.f32 %v2180, %v2181
        %v2183 = vrot.slane %v2182, 2
        %v2184 = vmax.f32 %v2182, %v2183
        %v2185 = vrot.slane %v2184, 1
        %v2186 = vmax.f32 %v2184, %v2185
        %v2187 = vsel %vm2164, %v2108, -inf
        %v2188 = vsel %vm2164, %v2109, -inf
        %v2189 = vmax.f32 %v2187, %v2188
        %v2190 = vsel %vm2164, %v2110, -inf
        %v2191 = vmax.f32 %v2189, %v2190
        %v2192 = vsel %vm2164, %v2111, -inf
        %v2193 = vmax.f32 %v2191, %v2192
        %v2194 = vsel %vm2164, %v2112, -inf
        %v2195 = vmax.f32 %v2193, %v2194
        %v2196 = vsel %vm2164, %v2113, -inf
        %v2197 = vmax.f32 %v2195, %v2196
        %v2198 = vsel %vm2164, %v2114, -inf
        %v2199 = vmax.f32 %v2197, %v2198
        %v2200 = vsel %vm2178, %v2115, -inf
        %v2201 = vmax.f32 %v2199, %v2200
        %v2202 = vrot.slane %v2201, 4
        %v2203 = vmax.f32 %v2201, %v2202
        %v2204 = vrot.slane %v2203, 2
        %v2205 = vmax.f32 %v2203, %v2204
        %v2206 = vrot.slane %v2205, 1
        %v2207 = vmax.f32 %v2205, %v2206
        %v2208 = vsel %vm2164, %v2116, -inf
        %v2209 = vsel %vm2164, %v2117, -inf
        %v2210 = vmax.f32 %v2208, %v2209
        %v2211 = vsel %vm2164, %v2118, -inf
        %v2212 = vmax.f32 %v2210, %v2211
        %v2213 = vsel %vm2164, %v2119, -inf
        %v2214 = vmax.f32 %v2212, %v2213
        %v2215 = vsel %vm2164, %v2120, -inf
        %v2216 = vmax.f32 %v2214, %v2215
        %v2217 = vsel %vm2164, %v2121, -inf
        %v2218 = vmax.f32 %v2216, %v2217
        %v2219 = vsel %vm2164, %v2122, -inf
        %v2220 = vmax.f32 %v2218, %v2219
        %v2221 = vsel %vm2178, %v2123, -inf
        %v2222 = vmax.f32 %v2220, %v2221
        %v2223 = vrot.slane %v2222, 4
        %v2224 = vmax.f32 %v2222, %v2223
        %v2225 = vrot.slane %v2224, 2
        %v2226 = vmax.f32 %v2224, %v2225
        %v2227 = vrot.slane %v2226, 1
        %v2228 = vmax.f32 %v2226, %v2227
        %v2229 = vsel %vm2164, %v2124, -inf
        %v2230 = vsel %vm2164, %v2125, -inf
        %v2231 = vmax.f32 %v2229, %v2230
        %v2232 = vsel %vm2164, %v2126, -inf
        %v2233 = vmax.f32 %v2231, %v2232
        %v2234 = vsel %vm2164, %v2127, -inf
        %v2235 = vmax.f32 %v2233, %v2234
        %v2236 = vsel %vm2164, %v2128, -inf
        %v2237 = vmax.f32 %v2235, %v2236
        %v2238 = vsel %vm2164, %v2129, -inf
        %v2239 = vmax.f32 %v2237, %v2238
        %v2240 = vsel %vm2164, %v2130, -inf
        %v2241 = vmax.f32 %v2239, %v2240
        %v2242 = vsel %vm2178, %v2131, -inf
        %v2243 = vmax.f32 %v2241, %v2242
        %v2244 = vrot.slane %v2243, 4
        %v2245 = vmax.f32 %v2243, %v2244
        %v2246 = vrot.slane %v2245, 2
        %v2247 = vmax.f32 %v2245, %v2246
        %v2248 = vrot.slane %v2247, 1
        %v2249 = vmax.f32 %v2247, %v2248
        %v2250 = vsel %vm2164, %v2132, -inf
        %v2251 = vsel %vm2164, %v2133, -inf
        %v2252 = vmax.f32 %v2250, %v2251
        %v2253 = vsel %vm2164, %v2134, -inf
        %v2254 = vmax.f32 %v2252, %v2253
        %v2255 = vsel %vm2164, %v2135, -inf
        %v2256 = vmax.f32 %v2254, %v2255
        %v2257 = vsel %vm2164, %v2136, -inf
        %v2258 = vmax.f32 %v2256, %v2257
        %v2259 = vsel %vm2164, %v2137, -inf
        %v2260 = vmax.f32 %v2258, %v2259
        %v2261 = vsel %vm2164, %v2138, -inf
        %v2262 = vmax.f32 %v2260, %v2261
        %v2263 = vsel %vm2178, %v2139, -inf
        %v2264 = vmax.f32 %v2262, %v2263
        %v2265 = vrot.slane %v2264, 4
        %v2266 = vmax.f32 %v2264, %v2265
        %v2267 = vrot.slane %v2266, 2
        %v2268 = vmax.f32 %v2266, %v2267
        %v2269 = vrot.slane %v2268, 1
        %v2270 = vmax.f32 %v2268, %v2269
        %v2271 = vsel %vm2164, %v2140, -inf
        %v2272 = vsel %vm2164, %v2141, -inf
        %v2273 = vmax.f32 %v2271, %v2272
        %v2274 = vsel %vm2164, %v2142, -inf
        %v2275 = vmax.f32 %v2273, %v2274
        %v2276 = vsel %vm2164, %v2143, -inf
        %v2277 = vmax.f32 %v2275, %v2276
        %v2278 = vsel %vm2164, %v2144, -inf
        %v2279 = vmax.f32 %v2277, %v2278
        %v2280 = vsel %vm2164, %v2145, -inf
        %v2281 = vmax.f32 %v2279, %v2280
        %v2282 = vsel %vm2164, %v2146, -inf
        %v2283 = vmax.f32 %v2281, %v2282
        %v2284 = vsel %vm2178, %v2147, -inf
        %v2285 = vmax.f32 %v2283, %v2284
        %v2286 = vrot.slane %v2285, 4
        %v2287 = vmax.f32 %v2285, %v2286
        %v2288 = vrot.slane %v2287, 2
        %v2289 = vmax.f32 %v2287, %v2288
        %v2290 = vrot.slane %v2289, 1
        %v2291 = vmax.f32 %v2289, %v2290
        %v2292 = vsel %vm2164, %v2148, -inf
        %v2293 = vsel %vm2164, %v2149, -inf
        %v2294 = vmax.f32 %v2292, %v2293
        %v2295 = vsel %vm2164, %v2150, -inf
        %v2296 = vmax.f32 %v2294, %v2295
        %v2297 = vsel %vm2164, %v2151, -inf
        %v2298 = vmax.f32 %v2296, %v2297
        %v2299 = vsel %vm2164, %v2152, -inf
        %v2300 = vmax.f32 %v2298, %v2299
        %v2301 = vsel %vm2164, %v2153, -inf
        %v2302 = vmax.f32 %v2300, %v2301
        %v2303 = vsel %vm2164, %v2154, -inf
        %v2304 = vmax.f32 %v2302, %v2303
        %v2305 = vsel %vm2178, %v2155, -inf
        %v2306 = vmax.f32 %v2304, %v2305
        %v2307 = vrot.slane %v2306, 4
        %v2308 = vmax.f32 %v2306, %v2307
        %v2309 = vrot.slane %v2308, 2
        %v2310 = vmax.f32 %v2308, %v2309
        %v2311 = vrot.slane %v2310, 1
        %v2312 = vmax.f32 %v2310, %v2311
        %v2313 = vsel %vm2164, %v2156, -inf
        %v2314 = vsel %vm2164, %v2157, -inf
        %v2315 = vmax.f32 %v2313, %v2314
        %v2316 = vsel %vm2164, %v2158, -inf
        %v2317 = vmax.f32 %v2315, %v2316
        %v2318 = vsel %vm2164, %v2159, -inf
        %v2319 = vmax.f32 %v2317, %v2318
        %v2320 = vsel %vm2164, %v2160, -inf
        %v2321 = vmax.f32 %v2319, %v2320
        %v2322 = vsel %vm2164, %v2161, -inf
        %v2323 = vmax.f32 %v2321, %v2322
        %v2324 = vsel %vm2164, %v2162, -inf
        %v2325 = vmax.f32 %v2323, %v2324
        %v2326 = vsel %vm2178, %v2163, -inf
        %v2327 = vmax.f32 %v2325, %v2326
        %v2328 = vrot.slane %v2327, 4
        %v2329 = vmax.f32 %v2327, %v2328
        %v2330 = vrot.slane %v2329, 2
        %v2331 = vmax.f32 %v2329, %v2330
        %v2332 = vrot.slane %v2331, 1
        %v2333 = vmax.f32 %v2331, %v2332
        %v2334 = vld [vmem:[%s2] sm:$0x1]
        %v2336 = vlaneseq
        %v2337 = vshrl.u32 %v2336, 7
        %v2338 = vsub.s32 0, %v2337
        %v2339 = vrot.slane %v2334, %v2338
        %v2341 = vadd.f32 %v2186, %v2339
        %v2342 = vadd.f32 %v2207, %v2339
        %v2343 = vadd.f32 %v2228, %v2339
        %v2344 = vadd.f32 %v2249, %v2339
        %v2345 = vadd.f32 %v2270, %v2339
        %v2346 = vadd.f32 %v2291, %v2339
        %v2347 = vadd.f32 %v2312, %v2339
        %v2348 = vadd.f32 %v2333, %v2339
        %v2349 = vmax.f32 %v2341, 0.0
        %v2350 = vmax.f32 %v2342, 0.0
        %v2351 = vmax.f32 %v2343, 0.0
        %v2352 = vmax.f32 %v2344, 0.0
        %v2353 = vmax.f32 %v2345, 0.0
        %v2354 = vmax.f32 %v2346, 0.0
        %v2355 = vmax.f32 %v2347, 0.0
        %v2356 = vmax.f32 %v2348, 0.0
        %v2365 = vrot.slane %v2350, 7
        %vm2366 = vcmask 1041409
        %v2367 = vsel %vm2366, %v2365, %v2349
        %v2368 = vrot.slane %v2351, 6
        %vm2369 = vcmask 1042434
        %v2370 = vsel %vm2369, %v2368, %v2367
        %v2371 = vrot.slane %v2352, 5
        %vm2372 = vcmask 1043459
        %v2373 = vsel %vm2372, %v2371, %v2370
        %v2374 = vrot.slane %v2353, 4
        %vm2375 = vcmask 1044484
        %v2376 = vsel %vm2375, %v2374, %v2373
        %v2377 = vrot.slane %v2354, 3
        %vm2378 = vcmask 1045509
        %v2379 = vsel %vm2378, %v2377, %v2376
        %v2380 = vrot.slane %v2355, 2
        %vm2381 = vcmask 1046534
        %v2382 = vsel %vm2381, %v2380, %v2379
        %v2383 = vrot.slane %v2356, 1
        %vm2384 = vcmask 1047559
        %v2385 = vsel %vm2384, %v2383, %v2382
        %v2387 = vsel %vm2164, %v2385, 0.0
        %2388 = vadd.xlane.f32.xlu0 %v2387
        %v2389 = vpop.xlane.xlu0 %2388
        %v2391 = vrot.slane %v2389, 1
        %v2392 = vrot.slane %v2389, 2
        %v2393 = vrot.slane %v2389, 3
        %v2394 = vrot.slane %v2389, 4
        %v2395 = vrot.slane %v2389, 5
        %v2396 = vrot.slane %v2389, 6
        %v2397 = vrot.slane %v2389, 7
        %v2406 = vmul.f32 %v2349, %v2389
        %v2407 = vmul.f32 %v2350, %v2391
        %v2408 = vmul.f32 %v2351, %v2392
        %v2409 = vmul.f32 %v2352, %v2393
        %v2410 = vmul.f32 %v2353, %v2394
        %v2411 = vmul.f32 %v2354, %v2395
        %v2412 = vmul.f32 %v2355, %v2396
        %v2413 = vmul.f32 %v2356, %v2397
        %v2422 = vrot.slane %v2407, 7
        %v2423 = vsel %vm2366, %v2422, %v2406
        %v2424 = vrot.slane %v2408, 6
        %v2425 = vsel %vm2369, %v2424, %v2423
        %v2426 = vrot.slane %v2409, 5
        %v2427 = vsel %vm2372, %v2426, %v2425
        %v2428 = vrot.slane %v2410, 4
        %v2429 = vsel %vm2375, %v2428, %v2427
        %v2430 = vrot.slane %v2411, 3
        %v2431 = vsel %vm2378, %v2430, %v2429
        %v2432 = vrot.slane %v2412, 2
        %v2433 = vsel %vm2381, %v2432, %v2431
        %v2434 = vrot.slane %v2413, 1
        %v2435 = vsel %vm2384, %v2434, %v2433
        %v2437 = vsel %vm2164, %v2435, -inf
        %2438 = vmax.xlane.f32.xlu0 %v2437
        %v2439 = vpop.xlane.xlu0 %2438
        %v2441 = vrot.slane %v2439, 1
        %v2442 = vrot.slane %v2439, 2
        %v2443 = vrot.slane %v2439, 3
        %v2444 = vrot.slane %v2439, 4
        %v2445 = vrot.slane %v2439, 5
        %v2446 = vrot.slane %v2439, 6
        %v2447 = vrot.slane %v2439, 7
        %v2456 = vsub.f32 %v2406, %v2439
        %v2457 = vsub.f32 %v2407, %v2441
        %v2458 = vsub.f32 %v2408, %v2442
        %v2459 = vsub.f32 %v2409, %v2443
        %v2460 = vsub.f32 %v2410, %v2444
        %v2461 = vsub.f32 %v2411, %v2445
        %v2462 = vsub.f32 %v2412, %v2446
        %v2463 = vsub.f32 %v2413, %v2447
        %v2464 = vmul.f32 %v2456, 1.442695
        %v2465 = vpow.pop %v2464
        %v2466 = vmul.f32 %v2457, 1.442695
        %v2467 = vpow.pop %v2466
        %v2468 = vmul.f32 %v2458, 1.442695
        %v2469 = vpow.pop %v2468
        %v2470 = vmul.f32 %v2459, 1.442695
        %v2471 = vpow.pop %v2470
        %v2472 = vmul.f32 %v2460, 1.442695
        %v2473 = vpow.pop %v2472
        %v2474 = vmul.f32 %v2461, 1.442695
        %v2475 = vpow.pop %v2474
        %v2476 = vmul.f32 %v2462, 1.442695
        %v2477 = vpow.pop %v2476
        %v2478 = vmul.f32 %v2463, 1.442695
        %v2479 = vpow.pop %v2478
        %v2488 = vrot.slane %v2467, 7
        %v2489 = vsel %vm2366, %v2488, %v2465
        %v2490 = vrot.slane %v2469, 6
        %v2491 = vsel %vm2369, %v2490, %v2489
        %v2492 = vrot.slane %v2471, 5
        %v2493 = vsel %vm2372, %v2492, %v2491
        %v2494 = vrot.slane %v2473, 4
        %v2495 = vsel %vm2375, %v2494, %v2493
        %v2496 = vrot.slane %v2475, 3
        %v2497 = vsel %vm2378, %v2496, %v2495
        %v2498 = vrot.slane %v2477, 2
        %v2499 = vsel %vm2381, %v2498, %v2497
        %v2500 = vrot.slane %v2479, 1
        %v2501 = vsel %vm2384, %v2500, %v2499
        %v2503 = vsel %vm2164, %v2501, 0.0
        %2504 = vadd.xlane.f32.xlu0 %v2503
        %v2505 = vpop.xlane.xlu0 %2504
        %v2506 = vrcp.pop %v2505
        %v2508 = vrot.slane %v2506, 1
        %v2509 = vrot.slane %v2506, 2
        %v2510 = vrot.slane %v2506, 3
        %v2511 = vrot.slane %v2506, 4
        %v2512 = vrot.slane %v2506, 5
        %v2513 = vrot.slane %v2506, 6
        %v2514 = vrot.slane %v2506, 7
        %v2523 = vmul.f32 %v2465, %v2506
        %v2524 = vmul.f32 %v2467, %v2508
        %v2525 = vmul.f32 %v2469, %v2509
        %v2526 = vmul.f32 %v2471, %v2510
        %v2527 = vmul.f32 %v2473, %v2511
        %v2528 = vmul.f32 %v2475, %v2512
        %v2529 = vmul.f32 %v2477, %v2513
        %v2530 = vmul.f32 %v2479, %v2514
        %v2531 = vmul.f32 %v2523, %v2389
        %v2532 = vmul.f32 %v2524, %v2391
        %v2533 = vmul.f32 %v2525, %v2392
        %v2534 = vmul.f32 %v2526, %v2393
        %v2535 = vmul.f32 %v2527, %v2394
        %v2536 = vmul.f32 %v2528, %v2395
        %v2537 = vmul.f32 %v2529, %v2396
        %v2538 = vmul.f32 %v2530, %v2397
        %v2539 = vld [vmem:[%s3] sm:$0xff]
        %v2540 = vld [vmem:[%s4] sm:$0x1]
        %v2542 = vlaneseq
        %v2543 = vshrl.u32 %v2542, 7
        %v2544 = vsub.s32 0, %v2543
        %v2545 = vrot.slane %v2540, %v2544
        %v2555 = vrot.slane %v2532, 7
        %v2556 = vsel %vm2366, %v2555, %v2531
        %v2557 = vrot.slane %v2533, 6
        %v2558 = vsel %vm2369, %v2557, %v2556
        %v2559 = vrot.slane %v2534, 5
        %v2560 = vsel %vm2372, %v2559, %v2558
        %v2561 = vrot.slane %v2535, 4
        %v2562 = vsel %vm2375, %v2561, %v2560
        %v2563 = vrot.slane %v2536, 3
        %v2564 = vsel %vm2378, %v2563, %v2562
        %v2565 = vrot.slane %v2537, 2
        %v2566 = vsel %vm2381, %v2565, %v2564
        %v2567 = vrot.slane %v2538, 1
        %v2568 = vsel %vm2384, %v2567, %v2566
        %v2569 = vsel %vm2164, %v2568, 0
        %2571 = vmatprep.subr.mxu0 0.0
        %2572 = vmatpush1.msra.mxu0 %v2539
        %2573 = vmatprep.subr.mxu0 0.0
        %2574 = vmatpush1.msra.mxu0 0.0
        %2575 = vmatprep.subr.mxu0 0.0
        %2576 = vmatpush1.msra.mxu0 0.0
        %2577 = vmatprep.subr.mxu0 0.0
        %2578 = vmatpush1.msra.mxu0 0.0
        %2579 = vmatprep.subr.mxu0 0.0
        %2580 = vmatpush1.msra.mxu0 0.0
        %2581 = vmatprep.subr.mxu0 0.0
        %2582 = vmatpush1.msra.mxu0 0.0
        %2583 = vmatprep.subr.mxu0 0.0
        %2584 = vmatpush1.msra.mxu0 0.0
        %2585 = vmatprep.subr.mxu0 0.0
        %2586 = vmatpush1.msra.mxu0 0.0
        %2587 = vmatprep.subr.mxu0 0.0
        %2588 = vmatpush1.msra.mxu0 0.0
        %2589 = vmatprep.subr.mxu0 0.0
        %2590 = vmatpush1.msra.mxu0 0.0
        %2591 = vmatprep.subr.mxu0 0.0
        %2592 = vmatpush1.msra.mxu0 0.0
        %2593 = vmatprep.subr.mxu0 0.0
        %2594 = vmatpush1.msra.mxu0 0.0
        %2595 = vmatprep.subr.mxu0 0.0
        %2596 = vmatpush1.msra.mxu0 0.0
        %2597 = vmatprep.subr.mxu0 0.0
        %2598 = vmatpush1.msra.mxu0 0.0
        %2599 = vmatprep.subr.mxu0 0.0
        %2600 = vmatpush1.msra.mxu0 0.0
        %2601 = vmatprep.subr.mxu0 0.0
        %2602 = vmatpush1.msra.mxu0 0.0
        %2603 = vmatprep.subr.mxu0 0.0
        %2604 = vmatpush1.msra.mxu0 0.0
        %2605 = vmatprep.subr.mxu0 0.0
        %2606 = vmatpush1.msra.mxu0 0.0
        %2607 = vmatprep.subr.mxu0 0.0
        %2608 = vmatpush1.msra.mxu0 0.0
        %2609 = vmatprep.subr.mxu0 0.0
        %2610 = vmatpush1.msra.mxu0 0.0
        %2611 = vmatprep.subr.mxu0 0.0
        %2612 = vmatpush1.msra.mxu0 0.0
        %2613 = vmatprep.subr.mxu0 0.0
        %2614 = vmatpush1.msra.mxu0 0.0
        %2615 = vmatprep.subr.mxu0 0.0
        %2616 = vmatpush1.msra.mxu0 0.0
        %2617 = vmatprep.subr.mxu0 0.0
        %2618 = vmatpush1.msra.mxu0 0.0
        %2619 = vmatprep.subr.mxu0 0.0
        %2620 = vmatpush1.msra.mxu0 0.0
        %2621 = vmatprep.subr.mxu0 0.0
        %2622 = vmatpush1.msra.mxu0 0.0
        %2623 = vmatprep.subr.mxu0 0.0
        %2624 = vmatpush1.msra.mxu0 0.0
        %2625 = vmatprep.subr.mxu0 0.0
        %2626 = vmatpush1.msra.mxu0 0.0
        %2627 = vmatprep.subr.mxu0 0.0
        %2628 = vmatpush1.msra.mxu0 0.0
        %2629 = vmatprep.subr.mxu0 0.0
        %2630 = vmatpush1.msra.mxu0 0.0
        %2631 = vmatprep.subr.mxu0 0.0
        %2632 = vmatpush1.msra.mxu0 0.0
        %2633 = vmatprep.subr.mxu0 0.0
        %2634 = vmatpush1.msra.mxu0 0.0
        %2635 = vmatprep.mubr.f32.mxu0 0.0
        %2636 = vmatmul.mubr.f32.gmra.mrb[0].mxu0 %v2569
        %v2637 = vpop.f32.mrb[0].mxu0
        %v2638 = vadd.f32 %v2545, %v2637
        %v2639 = vpop.f32.mrb[0].mxu0
        %2640 = vdwg.mxu0
        %v2641 = vlaneseq
        %v2642 = vand.u32 %v2641, 127
        %vm2643 = vcmp.lt.s32.totalorder %v2642, 4
        %v2644 = vsel %vm2643, %v2638, -1e+30
        %2645 = vmax.xlane.f32.xlu0 %v2644
        %v2646 = vpop.xlane.xlu0 %2645
        %v2647 = vsub.f32 %v2644, %v2646
        %v2648 = vmul.f32 %v2647, 1.442695
        %v2649 = vpow.pop %v2648
        %v2650 = vsel %vm2643, %v2649, 0.0
        %2651 = vadd.xlane.f32.xlu0 %v2650
        %v2652 = vpop.xlane.xlu0 %2651
        %v2653 = vlog2.pop %v2652
        %v2654 = vmul.f32 %v2653, 0.6931472
        %v2655 = vsub.f32 %v2647, %v2654
        %2656 = vst [vmem:[%s220] sm:$0xff] %v2655
        %s2657 = sand.u32 %s137, 1
        %s2658 = scalar_lea.sflag [#allocation3], %s2657
        %s2659 = sand.u32 %s137, 1
        %s2660 = smul.addr %s2659, 8
        %s2661 = scalar_lea.vmem [#allocation2], %s2660
        // Predicated region
        $region41: #{tpu_custom_call.1} parent=39 // pred_check
          %p2662 = pneg %p147
        $region42: #{tpu_custom_call.1} parent=39 // pred_check_branch
          %2664 = sbr.rel (%p2662) target = $region44
        $region43: #{tpu_custom_call.1} parent=39 // pred_region
          %s2666 = ssub.s32 128, 128
          %2667 = vsyncadd %s2658, %s2666
          %s2668 = smul.addr %s19, 128
          %s2669 = scalar_lea.hbm %s5, %s2668
          %s2671 = sshll.u32 %s2661, 4
          %s2672 = int_to_ptr.vmem [resolvable:$true] %s2671
          %2674 = dma.vmem_to_hbm [thread:$0]  %s2672, 128, %s2669, %s2658
        $region44: #{tpu_custom_call.1} parent=39 // pred_fallthru
          _
      $region40: #{tpu_custom_call.1} parent=5 // pred_fallthru
        _
      %p2675 = scmp.le.s32.totalorder 2, %s14
      // Predicated region
      $region45: #{tpu_custom_call.1} parent=5 // pred_check
        %p2676 = pneg %p2675
      $region46: #{tpu_custom_call.1} parent=5 // pred_check_branch
        %2678 = sbr.rel (%p2676) target = $region48
      $region47: #{tpu_custom_call.1} parent=5 // pred_region
        %s2679 = ssub.s32 %s14, 2
        // Predicated region
        $region49: #{tpu_custom_call.1} parent=47 // pred_check
          %p2680 = pneg %p153
        $region50: #{tpu_custom_call.1} parent=47 // pred_check_branch
          %2682 = sbr.rel (%p2680) target = $region52
        $region51: #{tpu_custom_call.1} parent=47 // pred_region
          %s2683 = sand.u32 %s138, 1
          %s2684 = scalar_lea.sflag [#allocation3], %s2683
          %s2685 = sand.u32 %s138, 1
          %s2686 = smul.addr %s2685, 8
          %s2687 = scalar_lea.vmem [#allocation2], %s2686
          %2688 = dma.done %s2684, 128
        $region52: #{tpu_custom_call.1} parent=47 // pred_fallthru
          _
      $region48: #{tpu_custom_call.1} parent=5 // pred_fallthru
        _
    $region6: #{tpu_custom_call.1} parent=1 // loop_footer
      %s18 = sadd.s32 1, %s14
    $region7: #{tpu_custom_call.1} parent=1 // loop_footer_branch
      %13 = sbr.rel target = $region3
    $region8: #{tpu_custom_call.1} parent=1 // loop_exit
      _
    %2689 = vsyncpa [#allocation3], 1
    %s2690 = scalar_lea.sflag [#allocation3], 1
    %2691 = vsyncpa %s2690, 1

</llo_original>
